<compile_context>
chip_gen: v7x
topology: tpu7x:2x2x1
jax: 0.10.0
libtpu: 0.0.40
codegen_flags: <defaults>
</compile_context>

<pallas_src>
import functools

import jax
import jax.numpy as jnp
from jax.experimental import pallas as pl
from jax.experimental.pallas import tpu as pltpu


# ---------------------------------------------------------------------------
# Tiling helpers
# ---------------------------------------------------------------------------
_TM, _TN, _TK = 1024, 768, 512     # tile targets
_ROW_CAP = 2048                    # single-M-tile cap (rows)
_VMEM_LIMIT = 48 * 1024 * 1024     # <= ~48 MiB: safe on v7x, raises v5e/v6e default


def _round_up(x, m):
    return ((x + m - 1) // m) * m


def _pick_tile(size, align, target, prefer=None):
    """Tile (multiple of `align`, <= target) dividing round_up(size, align).

    When `prefer` is given, tiles that are a multiple of `prefer` (MXU
    systolic depth) win over merely-dividing candidates.
    """
    padded = _round_up(size, align)
    if padded <= target:
        return padded, padded
    best = None
    t = (target // align) * align
    while t >= align:
        if padded % t == 0:
            if prefer is not None and t % prefer == 0:
                return t, padded
            if best is None:
                best = t
        t -= align
    return (best if best is not None else align), padded


def _pick_row_tile(m, target=_TM):
    """Row (M) tile: full padded M if small, else minimal-waste tile."""
    m8 = _round_up(m, 8)
    if m8 <= _ROW_CAP:
        return m8, m8
    best_t, best_mp = None, None
    t = target
    while t >= target // 2:
        mp = _round_up(m8, t)
        if best_mp is None or mp < best_mp:
            best_t, best_mp = t, mp
        t -= 8
    return best_t, best_mp


def _pad2d(x, rows, cols):
    r, c = x.shape
    if r == rows and c == cols:
        return x
    return jnp.pad(x, ((0, rows - r), (0, cols - c)))


# ---------------------------------------------------------------------------
# In-kernel math helpers
# ---------------------------------------------------------------------------
def _gelu_exact(y):
    # erf-based GELU via Abramowitz & Stegun 7.1.26 (|err| < 1.5e-7); the
    # divide rides the EUP slot via pl.reciprocal(approx=True).
    x = y * 0.7071067811865476
    a1, a2, a3, a4, a5 = (0.254829592, -0.284496736, 1.421413741,
                          -1.453152027, 1.061405429)
    p = 0.3275911
    ax = jnp.abs(x)
    t = pl.reciprocal(1.0 + p * ax, approx=True)
    poly = ((((a5 * t + a4) * t + a3) * t + a2) * t + a1) * t
    erf_ax = 1.0 - poly * jnp.exp(-ax * ax)
    erf_x = jnp.where(x >= 0.0, erf_ax, -erf_ax)
    return 0.5 * y * (1.0 + erf_x)


# ---------------------------------------------------------------------------
# Fused (LayerNorm?) + matmul (+ bias, GELU?, residual?) kernel
# ---------------------------------------------------------------------------
def _matmul_kernel(x_ref, *rest, activation, has_residual, has_ln, k_real, eps):
    idx = 0
    if has_ln:
        g_ref, bln_ref = rest[0], rest[1]
        idx = 2
    else:
        g_ref = bln_ref = None
    w_ref, b_ref = rest[idx], rest[idx + 1]
    idx += 2
    if has_residual:
        r_ref = rest[idx]
        idx += 1
    else:
        r_ref = None
    o_ref, acc_ref = rest[idx], rest[idx + 1]

    @pl.when(pl.program_id(2) == 0)
    def _():
        acc_ref[...] = jnp.zeros_like(acc_ref)

    x = x_ref[...]
    if has_ln:
        # LN prologue (requires the full K row in this tile). Zero-padded K
        # columns are neutral: E[x], E[x^2] use 1/k_real and gamma/beta pads
        # are zero, so padded columns normalize to exactly 0.
        xf = x.astype(jnp.float32)
        inv_k = 1.0 / k_real
        mu = jnp.sum(xf, axis=-1, keepdims=True) * inv_k
        ex2 = jnp.sum(xf * xf, axis=-1, keepdims=True) * inv_k
        rstd = jax.lax.rsqrt(ex2 - mu * mu + eps)
        xf = (xf - mu) * rstd * g_ref[...] + bln_ref[...]
        x = xf.astype(jnp.bfloat16)

    acc_ref[...] += jnp.dot(x, w_ref[...], preferred_element_type=jnp.float32)

    @pl.when(pl.program_id(2) == pl.num_programs(2) - 1)
    def _():
        y = acc_ref[...] + b_ref[...]
        if activation == "gelu":
            y = _gelu_exact(y)
        if r_ref is not None:
            y = y + r_ref[...].astype(jnp.float32)   # bf16 residual, f32 add
        o_ref[...] = y.astype(o_ref.dtype)


def pallas_linear(x, w, b, activation=None, residual=None, ln=None,
                  out_dtype=jnp.bfloat16, eps=1e-5):
    """y = [LN(x)] @ w + b, optional GELU, optional fused residual add."""
    M, K = x.shape
    N = w.shape[1]
    tm, Mp = _pick_row_tile(M)
    tn, Np = _pick_tile(N, 128, _TN)
    if ln is not None:
        Kp = _round_up(K, 128)
        tk = Kp                                     # LN needs the full row
    else:
        tk, Kp = _pick_tile(K, 128, _TK, prefer=256)

    xp = _pad2d(x, Mp, Kp).astype(jnp.bfloat16)
    wp = _pad2d(w, Kp, Np).astype(jnp.bfloat16)
    bp = _pad2d(b.reshape(1, N).astype(jnp.float32), 1, Np)

    in_specs = [pl.BlockSpec((tm, tk), lambda i, j, k: (i, k))]
    inputs = [xp]
    if ln is not None:
        g, bln = ln
        in_specs += [pl.BlockSpec((1, tk), lambda i, j, k: (0, k)),
                     pl.BlockSpec((1, tk), lambda i, j, k: (0, k))]
        inputs += [_pad2d(g.reshape(1, K).astype(jnp.float32), 1, Kp),
                   _pad2d(bln.reshape(1, K).astype(jnp.float32), 1, Kp)]
    in_specs += [pl.BlockSpec((tk, tn), lambda i, j, k: (k, j)),
                 pl.BlockSpec((1, tn), lambda i, j, k: (0, j))]
    inputs += [wp, bp]
    if residual is not None:
        in_specs.append(pl.BlockSpec((tm, tn), lambda i, j, k: (i, j)))
        inputs.append(_pad2d(residual, Mp, Np).astype(jnp.bfloat16))

    kernel = functools.partial(
        _matmul_kernel, activation=activation,
        has_residual=residual is not None, has_ln=ln is not None,
        k_real=float(K), eps=eps)

    out = pl.pallas_call(
        kernel,
        out_shape=jax.ShapeDtypeStruct((Mp, Np), out_dtype),
        grid=(Mp // tm, Np // tn, Kp // tk),
        in_specs=in_specs,
        out_specs=pl.BlockSpec((tm, tn), lambda i, j, k: (i, j)),
        scratch_shapes=[pltpu.VMEM((tm, tn), jnp.float32)],
        compiler_params=pltpu.CompilerParams(
            dimension_semantics=("parallel", "parallel", "arbitrary"),
            vmem_limit_bytes=_VMEM_LIMIT),
    )(*inputs)
    if Mp != M or Np != N:
        out = out[:M, :N]
    return out


# ---------------------------------------------------------------------------
# Attention kernel: q:(B,Nq,D), fused kv:(B,Nk,2D) -> (B,Nq,D); heads split
# in-kernel via static lane slices (no XLA transposes / slice copies).
# ---------------------------------------------------------------------------
def _attention_kernel(q_ref, kv_ref, o_ref, *, heads, scale, d):
    dh = d // heads
    q = q_ref[0]     # (Nq, D)  bf16
    kv = kv_ref[0]   # (Nk, 2D) bf16
    outs = []
    for h in range(heads):
        lo = h * dh
        qh = q[:, lo:lo + dh]
        kh = kv[:, lo:lo + dh]
        vh = kv[:, d + lo:d + lo + dh]
        s = jnp.einsum("qd,kd->qk", qh, kh,
                       preferred_element_type=jnp.float32) * scale
        s = s - jnp.max(s, axis=-1, keepdims=True)
        p = jnp.exp(s)
        inv = pl.reciprocal(jnp.sum(p, axis=-1, keepdims=True), approx=True)
        o = jnp.dot((p * inv).astype(jnp.bfloat16), vh,
                    preferred_element_type=jnp.float32)
        outs.append(o)
    o_ref[0] = jnp.concatenate(outs, axis=-1).astype(o_ref.dtype)


def pallas_attention(q, kv, heads, scale):
    B, Nq, D = q.shape
    Nk = kv.shape[1]
    kernel = functools.partial(_attention_kernel, heads=heads, scale=scale, d=D)
    return pl.pallas_call(
        kernel,
        out_shape=jax.ShapeDtypeStruct((B, Nq, D), jnp.bfloat16),
        grid=(B,),
        in_specs=[pl.BlockSpec((1, Nq, D), lambda b: (b, 0, 0)),
                  pl.BlockSpec((1, Nk, 2 * D), lambda b: (b, 0, 0))],
        out_specs=pl.BlockSpec((1, Nq, D), lambda b: (b, 0, 0)),
        compiler_params=pltpu.CompilerParams(
            dimension_semantics=("parallel",),
            vmem_limit_bytes=_VMEM_LIMIT),
    )(q, kv)


# ---------------------------------------------------------------------------
# Glue
# ---------------------------------------------------------------------------
def linear_3d(x, w, b, activation=None, residual=None, ln=None,
              out_dtype=jnp.bfloat16):
    B, N, K = x.shape
    Nout = w.shape[1]
    r2 = None if residual is None else residual.reshape(B * N, Nout)
    y = pallas_linear(x.reshape(B * N, K), w, b, activation=activation,
                      residual=r2, ln=ln, out_dtype=out_dtype)
    return y.reshape(B, N, Nout)


def patchify(x, patch_size):
    """NCHW -> (B, num_patches, p*p*C), order (p1 p2 c) like einops Rearrange."""
    B, C, H, W = x.shape
    p = patch_size
    hp, wp = H // p, W // p
    x = x.reshape(B, C, hp, p, wp, p)
    x = x.transpose(0, 2, 4, 3, 5, 1)            # (B, hp, wp, p, p, C)
    return x.reshape(B, hp * wp, p * p * C)


# ---------------------------------------------------------------------------
# Model: parameters + forward
# ---------------------------------------------------------------------------
def init_params(key, *, img_size, patch_size, channels, num_classes, dim,
                depth, heads, mlp_dim):
    num_patches = (img_size // patch_size) ** 2
    patch_dim = channels * patch_size * patch_size

    def nrm(k, shape, scale=0.02):
        # Weights / embeddings stored in bf16 (MXU inputs); biases & LN in f32.
        return (scale * jax.random.normal(k, shape)).astype(jnp.bfloat16)

    keys = iter(jax.random.split(key, 16 + depth * 16))
    p = {
        "patch_w1": nrm(next(keys), (patch_dim, dim)),
        "patch_b1": jnp.zeros((dim,), jnp.float32),
        "patch_w2": nrm(next(keys), (patch_dim, dim)),
        "patch_b2": jnp.zeros((dim,), jnp.float32),
        "cls": nrm(next(keys), (1, 1, dim)),
        "pos1": nrm(next(keys), (1, num_patches + 1, dim)),
        "pos2": nrm(next(keys), (1, num_patches, dim)),
        "head_g": jnp.ones((dim,), jnp.float32),
        "head_b": jnp.zeros((dim,), jnp.float32),
        "head_w": nrm(next(keys), (dim, num_classes)),
        "head_bias": jnp.zeros((num_classes,), jnp.float32),
        "layers": [],
    }
    for _ in range(depth):
        layer = {
            "ln1_g": jnp.ones((dim,), jnp.float32),
            "ln1_b": jnp.zeros((dim,), jnp.float32),
            "ln_kv_g": jnp.ones((dim,), jnp.float32),
            "ln_kv_b": jnp.zeros((dim,), jnp.float32),
            "wq": nrm(next(keys), (dim, dim)),
            "bq": jnp.zeros((dim,), jnp.float32),
            # K and V projections fused into a single (dim, 2*dim) matmul.
            "wkv": nrm(next(keys), (dim, 2 * dim)),
            "bkv": jnp.zeros((2 * dim,), jnp.float32),
            "wo": nrm(next(keys), (dim, dim)),
            "bo": jnp.zeros((dim,), jnp.float32),
            "ln2_g": jnp.ones((dim,), jnp.float32),
            "ln2_b": jnp.zeros((dim,), jnp.float32),
            "mlp_w1": nrm(next(keys), (dim, mlp_dim)),
            "mlp_b1": jnp.zeros((mlp_dim,), jnp.float32),
            "mlp_w2": nrm(next(keys), (mlp_dim, dim)),
            "mlp_b2": jnp.zeros((dim,), jnp.float32),
        }
        p["layers"].append(layer)
    return p


def cross_attention_block(layer, t1, t2, heads):
    """Pre-norm cross attention: Q from stream 1, K/V from stream 2."""
    B, Nq, D = t1.shape
    dh = D // heads
    scale = 1.0 / (dh ** 0.5)

    # LN fused into the Q / fused-KV projection matmuls (no standalone LN pass).
    q = linear_3d(t1, layer["wq"], layer["bq"],
                  ln=(layer["ln1_g"], layer["ln1_b"]))            # (B,Nq,D)
    kv = linear_3d(t2, layer["wkv"], layer["bkv"],
                   ln=(layer["ln_kv_g"], layer["ln_kv_b"]))       # (B,Nk,2D)

    o = pallas_attention(q, kv, heads, scale)                     # (B,Nq,D)
    # Out-projection with the residual add fused into the kernel epilogue.
    return linear_3d(o, layer["wo"], layer["bo"], residual=t1)


def salclass_forward(params, x1, x2, *, patch_size, heads):
    B = x1.shape[0]
    dim = params["patch_w1"].shape[1]

    # Patch embeddings for both modalities (tiled Pallas matmuls, bf16 out).
    t1 = linear_3d(patchify(x1, patch_size), params["patch_w1"], params["patch_b1"])
    t2 = linear_3d(patchify(x2, patch_size), params["patch_w2"], params["patch_b2"])

    # Prepend cls token to stream 1, add positional embeddings (bf16 stream).
    cls = jnp.broadcast_to(params["cls"], (B, 1, dim))
    t1 = jnp.concatenate([cls, t1], axis=1) + params["pos1"]
    t2 = t2 + params["pos2"]

    # Cross-modal transformer blocks (mode_1). Dropout = identity (eval).
    for layer in params["layers"]:
        t1 = cross_attention_block(layer, t1, t2, heads)
        h = linear_3d(t1, layer["mlp_w1"], layer["mlp_b1"], activation="gelu",
                      ln=(layer["ln2_g"], layer["ln2_b"]))
        t1 = linear_3d(h, layer["mlp_w2"], layer["mlp_b2"], residual=t1)

    # Classification head on the cls token (LN fused into the head matmul).
    # SalClass.forward returns the ViT output without the trailing nn.Softmax.
    cls_tok = t1[:, 0, :]                                          # (B, dim)
    logits = pallas_linear(cls_tok, params["head_w"], params["head_bias"],
                           ln=(params["head_g"], params["head_b"]),
                           out_dtype=jnp.float32)
    return logits


# ---------------------------------------------------------------------------
if __name__ == "__main__":
    # Small config consistent with the module's interface.
    IMG, PATCH, CHANNELS = 16, 8, 3
    NUM_CLASSES, DIM, DEPTH, HEADS, MLP_DIM = 10, 32, 2, 2, 64
    BATCH = 2

    key = jax.random.PRNGKey(0)
    k_params, k_x1, k_x2 = jax.random.split(key, 3)

    params = init_params(
        k_params, img_size=IMG, patch_size=PATCH, channels=CHANNELS,
        num_classes=NUM_CLASSES, dim=DIM, depth=DEPTH, heads=HEADS,
        mlp_dim=MLP_DIM,
    )

    x1 = jax.random.normal(k_x1, (BATCH, CHANNELS, IMG, IMG), jnp.float32)
    x2 = jax.random.normal(k_x2, (BATCH, CHANNELS, IMG, IMG), jnp.float32)

    fwd = jax.jit(functools.partial(salclass_forward,
                                    patch_size=PATCH, heads=HEADS))
    out = fwd(params, x1, x2)
    jax.block_until_ready(out)
    assert out.shape == (BATCH, NUM_CLASSES)
    print("KERNEL_OK")
</pallas_src>

<mosaic_0001>
module attributes {stable_mosaic.version = 11 : i64} {
  func.func @_matmul_kernel(%arg0: i32, %arg1: i32, %arg2: i32, %arg3: memref<8x256xbf16, #tpu.memory_space<vmem>>, %arg4: memref<256x128xbf16, #tpu.memory_space<vmem>>, %arg5: memref<1x128xf32, #tpu.memory_space<vmem>>, %arg6: memref<8x128xbf16, #tpu.memory_space<vmem>>, %arg7: memref<8x128xf32, #tpu.memory_space<vmem>>) attributes {dimension_semantics = [#tpu.dimension_semantics<parallel>, #tpu.dimension_semantics<parallel>, #tpu.dimension_semantics<arbitrary>], iteration_bounds = array<i64: 1, 1, 1>, scalar_prefetch = 0 : i64, scratch_operands = 1 : i64, tpu.core_type = #tpu.core_type<tc>, window_params = [{transform_indices = @transform_0, window_bounds = array<i64: 8, 256>}, {transform_indices = @transform_1, window_bounds = array<i64: 256, 128>}, {transform_indices = @transform_2, window_bounds = array<i64: 1, 128>}, {transform_indices = @transform_3, window_bounds = array<i64: 8, 128>}]} {
    %c0_i32 = arith.constant 0 : i32
    %0 = arith.cmpi eq, %arg2, %c0_i32 : i32
    %1 = arith.extui %0 : i1 to i32
    %c0_i32_0 = arith.constant 0 : i32
    %2 = arith.cmpi ne, %1, %c0_i32_0 : i32
    scf.if %2 {
      %cst_10 = arith.constant 0.000000e+00 : f32
      %12 = vector.broadcast %cst_10 : f32 to vector<8x128xf32>
      %c0_11 = arith.constant 0 : index
      %c0_12 = arith.constant 0 : index
      %13 = vector.load %arg7[%c0_11, %c0_12] : memref<8x128xf32, #tpu.memory_space<vmem>>, vector<8x128xf32>
      tpu.vector_store %arg7[%c0_11, %c0_12], %12 {strides = array<i32>} : memref<8x128xf32, #tpu.memory_space<vmem>>, vector<8x128xf32>,
    } else {
    }
    %c0 = arith.constant 0 : index
    %c0_1 = arith.constant 0 : index
    %3 = vector.load %arg3[%c0, %c0_1] : memref<8x256xbf16, #tpu.memory_space<vmem>>, vector<8x256xbf16>
    %c0_2 = arith.constant 0 : index
    %c0_3 = arith.constant 0 : index
    %4 = vector.load %arg7[%c0_2, %c0_3] : memref<8x128xf32, #tpu.memory_space<vmem>>, vector<8x128xf32>
    %c0_4 = arith.constant 0 : index
    %c0_5 = arith.constant 0 : index
    %5 = vector.load %arg4[%c0_4, %c0_5] : memref<256x128xbf16, #tpu.memory_space<vmem>>, vector<256x128xbf16>
    %cst = arith.constant dense<0.000000e+00> : vector<8x128xf32>
    %6 = tpu.matmul %3, %5, %cst {dimension_numbers = #tpu.dot_dimension_numbers<[1], [0], [0], [1], [0, 0, 1, 1], [], []>} : vector<8x256xbf16>, vector<256x128xbf16>, vector<8x128xf32> -> vector<8x128xf32>
    %7 = arith.addf %4, %6 : vector<8x128xf32>
    %c0_6 = arith.constant 0 : index
    %c0_7 = arith.constant 0 : index
    %8 = vector.load %arg7[%c0_6, %c0_7] : memref<8x128xf32, #tpu.memory_space<vmem>>, vector<8x128xf32>
    tpu.vector_store %arg7[%c0_6, %c0_7], %7 {strides = array<i32>} : memref<8x128xf32, #tpu.memory_space<vmem>>, vector<8x128xf32>,
    %c0_i32_8 = arith.constant 0 : i32
    %9 = arith.cmpi eq, %arg2, %c0_i32_8 : i32
    %10 = arith.extui %9 : i1 to i32
    %c0_i32_9 = arith.constant 0 : i32
    %11 = arith.cmpi ne, %10, %c0_i32_9 : i32
    scf.if %11 {
      %c0_10 = arith.constant 0 : index
      %c0_11 = arith.constant 0 : index
      %12 = vector.load %arg7[%c0_10, %c0_11] : memref<8x128xf32, #tpu.memory_space<vmem>>, vector<8x128xf32>
      %c0_12 = arith.constant 0 : index
      %c0_13 = arith.constant 0 : index
      %13 = vector.load %arg5[%c0_12, %c0_13] : memref<1x128xf32, #tpu.memory_space<vmem>>, vector<1x128xf32>
      %14 = vector.broadcast %13 : vector<1x128xf32> to vector<8x128xf32>
      %15 = arith.addf %12, %14 : vector<8x128xf32>
      %16 = arith.truncf %15 : vector<8x128xf32> to vector<8x128xbf16>
      %c0_14 = arith.constant 0 : index
      %c0_15 = arith.constant 0 : index
      %17 = vector.load %arg6[%c0_14, %c0_15] : memref<8x128xbf16, #tpu.memory_space<vmem>>, vector<8x128xbf16>
      tpu.vector_store %arg6[%c0_14, %c0_15], %16 {strides = array<i32>} : memref<8x128xbf16, #tpu.memory_space<vmem>>, vector<8x128xbf16>,
    } else {
    }
    return
  }
  func.func @transform_0(%arg0: i32, %arg1: i32, %arg2: i32) -> (i32, i32) {
    %c0_i32 = arith.constant 0 : i32
    return %arg0, %arg2 : i32, i32
  }
  func.func @transform_1(%arg0: i32, %arg1: i32, %arg2: i32) -> (i32, i32) {
    %c0_i32 = arith.constant 0 : i32
    return %arg2, %arg1 : i32, i32
  }
  func.func @transform_2(%arg0: i32, %arg1: i32, %arg2: i32) -> (i32, i32) {
    %c0_i32 = arith.constant 0 : i32
    %c0_i32_0 = arith.constant 0 : i32
    return %c0_i32, %arg1 : i32, i32
  }
  func.func @transform_3(%arg0: i32, %arg1: i32, %arg2: i32) -> (i32, i32) {
    %c0_i32 = arith.constant 0 : i32
    return %arg0, %arg1 : i32, i32
  }
}

module attributes {stable_mosaic.version = 11 : i64} {
  func.func @_matmul_kernel(%arg0: i32, %arg1: i32, %arg2: i32, %arg3: memref<16x128xbf16, #tpu.memory_space<vmem>>, %arg4: memref<1x128xf32, #tpu.memory_space<vmem>>, %arg5: memref<1x128xf32, #tpu.memory_space<vmem>>, %arg6: memref<128x128xbf16, #tpu.memory_space<vmem>>, %arg7: memref<1x128xf32, #tpu.memory_space<vmem>>, %arg8: memref<16x128xbf16, #tpu.memory_space<vmem>>, %arg9: memref<16x128xf32, #tpu.memory_space<vmem>>) attributes {dimension_semantics = [#tpu.dimension_semantics<parallel>, #tpu.dimension_semantics<parallel>, #tpu.dimension_semantics<arbitrary>], iteration_bounds = array<i64: 1, 1, 1>, scalar_prefetch = 0 : i64, scratch_operands = 1 : i64, tpu.core_type = #tpu.core_type<tc>, window_params = [{transform_indices = @transform_0, window_bounds = array<i64: 16, 128>}, {transform_indices = @transform_1, window_bounds = array<i64: 1, 128>}, {transform_indices = @transform_2, window_bounds = array<i64: 1, 128>}, {transform_indices = @transform_3, window_bounds = array<i64: 128, 128>}, {transform_indices = @transform_4, window_bounds = array<i64: 1, 128>}, {transform_indices = @transform_5, window_bounds = array<i64: 16, 128>}]} {
    %c0_i32 = arith.constant 0 : i32
    %0 = arith.cmpi eq, %arg2, %c0_i32 : i32
    %1 = arith.extui %0 : i1 to i32
    %c0_i32_0 = arith.constant 0 : i32
    %2 = arith.cmpi ne, %1, %c0_i32_0 : i32
    scf.if %2 {
      %cst_19 = arith.constant 0.000000e+00 : f32
      %38 = vector.broadcast %cst_19 : f32 to vector<16x128xf32>
      %c0_20 = arith.constant 0 : index
      %c0_21 = arith.constant 0 : index
      %39 = vector.load %arg9[%c0_20, %c0_21] : memref<16x128xf32, #tpu.memory_space<vmem>>, vector<16x128xf32>
      tpu.vector_store %arg9[%c0_20, %c0_21], %38 {strides = array<i32>} : memref<16x128xf32, #tpu.memory_space<vmem>>, vector<16x128xf32>,
    } else {
    }
    %c0 = arith.constant 0 : index
    %c0_1 = arith.constant 0 : index
    %3 = vector.load %arg3[%c0, %c0_1] : memref<16x128xbf16, #tpu.memory_space<vmem>>, vector<16x128xbf16>
    %4 = arith.extf %3 : vector<16x128xbf16> to vector<16x128xf32>
    %cst = arith.constant dense<0.000000e+00> : vector<16xf32>
    %5 = vector.multi_reduction <add>, %4, %cst [1] : vector<16x128xf32> to vector<16xf32>
    %6 = vector.shape_cast %5 : vector<16xf32> to vector<16x1xf32>
    %cst_2 = arith.constant 3.125000e-02 : f32
    %7 = vector.broadcast %cst_2 : f32 to vector<16x1xf32>
    %8 = arith.mulf %6, %7 : vector<16x1xf32>
    %9 = arith.mulf %4, %4 : vector<16x128xf32>
    %cst_3 = arith.constant dense<0.000000e+00> : vector<16xf32>
    %10 = vector.multi_reduction <add>, %9, %cst_3 [1] : vector<16x128xf32> to vector<16xf32>
    %11 = vector.shape_cast %10 : vector<16xf32> to vector<16x1xf32>
    %cst_4 = arith.constant 3.125000e-02 : f32
    %12 = vector.broadcast %cst_4 : f32 to vector<16x1xf32>
    %13 = arith.mulf %11, %12 : vector<16x1xf32>
    %14 = arith.mulf %8, %8 : vector<16x1xf32>
    %15 = arith.subf %13, %14 : vector<16x1xf32>
    %cst_5 = arith.constant 9.99999974E-6 : f32
    %16 = vector.broadcast %cst_5 : f32 to vector<16x1xf32>
    %17 = arith.addf %15, %16 : vector<16x1xf32>
    %18 = math.rsqrt %17 : vector<16x1xf32>
    %19 = vector.broadcast %8 : vector<16x1xf32> to vector<16x128xf32>
    %20 = arith.subf %4, %19 : vector<16x128xf32>
    %21 = vector.broadcast %18 : vector<16x1xf32> to vector<16x128xf32>
    %22 = arith.mulf %20, %21 : vector<16x128xf32>
    %c0_6 = arith.constant 0 : index
    %c0_7 = arith.constant 0 : index
    %23 = vector.load %arg4[%c0_6, %c0_7] : memref<1x128xf32, #tpu.memory_space<vmem>>, vector<1x128xf32>
    %24 = vector.broadcast %23 : vector<1x128xf32> to vector<16x128xf32>
    %25 = arith.mulf %22, %24 : vector<16x128xf32>
    %c0_8 = arith.constant 0 : index
    %c0_9 = arith.constant 0 : index
    %26 = vector.load %arg5[%c0_8, %c0_9] : memref<1x128xf32, #tpu.memory_space<vmem>>, vector<1x128xf32>
    %27 = vector.broadcast %26 : vector<1x128xf32> to vector<16x128xf32>
    %28 = arith.addf %25, %27 : vector<16x128xf32>
    %29 = arith.truncf %28 : vector<16x128xf32> to vector<16x128xbf16>
    %c0_10 = arith.constant 0 : index
    %c0_11 = arith.constant 0 : index
    %30 = vector.load %arg9[%c0_10, %c0_11] : memref<16x128xf32, #tpu.memory_space<vmem>>, vector<16x128xf32>
    %c0_12 = arith.constant 0 : index
    %c0_13 = arith.constant 0 : index
    %31 = vector.load %arg6[%c0_12, %c0_13] : memref<128x128xbf16, #tpu.memory_space<vmem>>, vector<128x128xbf16>
    %cst_14 = arith.constant dense<0.000000e+00> : vector<16x128xf32>
    %32 = tpu.matmul %29, %31, %cst_14 {dimension_numbers = #tpu.dot_dimension_numbers<[1], [0], [0], [1], [0, 0, 1, 1], [], []>} : vector<16x128xbf16>, vector<128x128xbf16>, vector<16x128xf32> -> vector<16x128xf32>
    %33 = arith.addf %30, %32 : vector<16x128xf32>
    %c0_15 = arith.constant 0 : index
    %c0_16 = arith.constant 0 : index
    %34 = vector.load %arg9[%c0_15, %c0_16] : memref<16x128xf32, #tpu.memory_space<vmem>>, vector<16x128xf32>
    tpu.vector_store %arg9[%c0_15, %c0_16], %33 {strides = array<i32>} : memref<16x128xf32, #tpu.memory_space<vmem>>, vector<16x128xf32>,
    %c0_i32_17 = arith.constant 0 : i32
    %35 = arith.cmpi eq, %arg2, %c0_i32_17 : i32
    %36 = arith.extui %35 : i1 to i32
    %c0_i32_18 = arith.constant 0 : i32
    %37 = arith.cmpi ne, %36, %c0_i32_18 : i32
    scf.if %37 {
      %c0_19 = arith.constant 0 : index
      %c0_20 = arith.constant 0 : index
      %38 = vector.load %arg9[%c0_19, %c0_20] : memref<16x128xf32, #tpu.memory_space<vmem>>, vector<16x128xf32>
      %c0_21 = arith.constant 0 : index
      %c0_22 = arith.constant 0 : index
      %39 = vector.load %arg7[%c0_21, %c0_22] : memref<1x128xf32, #tpu.memory_space<vmem>>, vector<1x128xf32>
      %40 = vector.broadcast %39 : vector<1x128xf32> to vector<16x128xf32>
      %41 = arith.addf %38, %40 : vector<16x128xf32>
      %42 = arith.truncf %41 : vector<16x128xf32> to vector<16x128xbf16>
      %c0_23 = arith.constant 0 : index
      %c0_24 = arith.constant 0 : index
      %43 = vector.load %arg8[%c0_23, %c0_24] : memref<16x128xbf16, #tpu.memory_space<vmem>>, vector<16x128xbf16>
      tpu.vector_store %arg8[%c0_23, %c0_24], %42 {strides = array<i32>} : memref<16x128xbf16, #tpu.memory_space<vmem>>, vector<16x128xbf16>,
    } else {
    }
    return
  }
  func.func @transform_0(%arg0: i32, %arg1: i32, %arg2: i32) -> (i32, i32) {
    %c0_i32 = arith.constant 0 : i32
    return %arg0, %arg2 : i32, i32
  }
  func.func @transform_1(%arg0: i32, %arg1: i32, %arg2: i32) -> (i32, i32) {
    %c0_i32 = arith.constant 0 : i32
    %c0_i32_0 = arith.constant 0 : i32
    return %c0_i32, %arg2 : i32, i32
  }
  func.func @transform_2(%arg0: i32, %arg1: i32, %arg2: i32) -> (i32, i32) {
    %c0_i32 = arith.constant 0 : i32
    %c0_i32_0 = arith.constant 0 : i32
    return %c0_i32, %arg2 : i32, i32
  }
  func.func @transform_3(%arg0: i32, %arg1: i32, %arg2: i32) -> (i32, i32) {
    %c0_i32 = arith.constant 0 : i32
    return %arg2, %arg1 : i32, i32
  }
  func.func @transform_4(%arg0: i32, %arg1: i32, %arg2: i32) -> (i32, i32) {
    %c0_i32 = arith.constant 0 : i32
    %c0_i32_0 = arith.constant 0 : i32
    return %c0_i32, %arg1 : i32, i32
  }
  func.func @transform_5(%arg0: i32, %arg1: i32, %arg2: i32) -> (i32, i32) {
    %c0_i32 = arith.constant 0 : i32
    return %arg0, %arg1 : i32, i32
  }
}

module attributes {stable_mosaic.version = 11 : i64} {
  func.func @_attention_kernel(%arg0: i32, %arg1: memref<1x5x32xbf16, #tpu.memory_space<vmem>>, %arg2: memref<1x4x64xbf16, #tpu.memory_space<vmem>>, %arg3: memref<1x5x32xbf16, #tpu.memory_space<vmem>>) attributes {dimension_semantics = [#tpu.dimension_semantics<parallel>], iteration_bounds = array<i64: 2>, scalar_prefetch = 0 : i64, scratch_operands = 0 : i64, tpu.core_type = #tpu.core_type<tc>, window_params = [{transform_indices = @transform_0, window_bounds = array<i64: 1, 5, 32>}, {transform_indices = @transform_1, window_bounds = array<i64: 1, 4, 64>}, {transform_indices = @transform_2, window_bounds = array<i64: 1, 5, 32>}]} {
    %c0 = arith.constant 0 : index
    %c0_0 = arith.constant 0 : index
    %c0_1 = arith.constant 0 : index
    %0 = vector.load %arg1[%c0, %c0_0, %c0_1] : memref<1x5x32xbf16, #tpu.memory_space<vmem>>, vector<1x5x32xbf16>
    %1 = vector.shape_cast %0 : vector<1x5x32xbf16> to vector<5x32xbf16>
    %c0_2 = arith.constant 0 : index
    %c0_3 = arith.constant 0 : index
    %c0_4 = arith.constant 0 : index
    %2 = vector.load %arg2[%c0_2, %c0_3, %c0_4] : memref<1x4x64xbf16, #tpu.memory_space<vmem>>, vector<1x4x64xbf16>
    %3 = vector.shape_cast %2 : vector<1x4x64xbf16> to vector<4x64xbf16>
    %4 = vector.extract_strided_slice %1 {offsets = [0, 0], sizes = [5, 16], strides = [1, 1]} : vector<5x32xbf16> to vector<5x16xbf16>
    %5 = vector.extract_strided_slice %3 {offsets = [0, 0], sizes = [4, 16], strides = [1, 1]} : vector<4x64xbf16> to vector<4x16xbf16>
    %6 = vector.extract_strided_slice %3 {offsets = [0, 32], sizes = [4, 16], strides = [1, 1]} : vector<4x64xbf16> to vector<4x16xbf16>
    "tpu.trace_start"() <{level = 10 : i32, message = "qd,kd->qk"}> : () -> ()
    %cst = arith.constant dense<0.000000e+00> : vector<5x4xf32>
    %7 = tpu.matmul %4, %5, %cst {dimension_numbers = #tpu.dot_dimension_numbers<[1], [1], [0], [0], [0, 0, 1, 0], [], []>} : vector<5x16xbf16>, vector<4x16xbf16>, vector<5x4xf32> -> vector<5x4xf32>
    "tpu.trace_stop"() : () -> ()
    %cst_5 = arith.constant 2.500000e-01 : f32
    %8 = vector.broadcast %cst_5 : f32 to vector<5x4xf32>
    %9 = arith.mulf %7, %8 : vector<5x4xf32>
    %cst_6 = arith.constant dense<0xFF800000> : vector<5xf32>
    %10 = vector.multi_reduction <maximumf>, %9, %cst_6 [1] : vector<5x4xf32> to vector<5xf32>
    %11 = vector.shape_cast %10 : vector<5xf32> to vector<5x1xf32>
    %12 = vector.broadcast %11 : vector<5x1xf32> to vector<5x4xf32>
    %13 = arith.subf %9, %12 : vector<5x4xf32>
    %14 = math.exp %13 : vector<5x4xf32>
    %cst_7 = arith.constant dense<0.000000e+00> : vector<5xf32>
    %15 = vector.multi_reduction <add>, %14, %cst_7 [1] : vector<5x4xf32> to vector<5xf32>
    %16 = vector.shape_cast %15 : vector<5xf32> to vector<5x1xf32>
    %17 = tpu.reciprocal %16 {approx = true} : vector<5x1xf32> -> vector<5x1xf32>
    %18 = vector.broadcast %17 : vector<5x1xf32> to vector<5x4xf32>
    %19 = arith.mulf %14, %18 : vector<5x4xf32>
    %20 = arith.truncf %19 : vector<5x4xf32> to vector<5x4xbf16>
    %cst_8 = arith.constant dense<0.000000e+00> : vector<5x16xf32>
    %21 = tpu.matmul %20, %6, %cst_8 {dimension_numbers = #tpu.dot_dimension_numbers<[1], [0], [0], [1], [0, 0, 1, 1], [], []>} : vector<5x4xbf16>, vector<4x16xbf16>, vector<5x16xf32> -> vector<5x16xf32>
    %22 = vector.extract_strided_slice %1 {offsets = [0, 16], sizes = [5, 16], strides = [1, 1]} : vector<5x32xbf16> to vector<5x16xbf16>
    %23 = vector.extract_strided_slice %3 {offsets = [0, 16], sizes = [4, 16], strides = [1, 1]} : vector<4x64xbf16> to vector<4x16xbf16>
    %24 = vector.extract_strided_slice %3 {offsets = [0, 48], sizes = [4, 16], strides = [1, 1]} : vector<4x64xbf16> to vector<4x16xbf16>
    "tpu.trace_start"() <{level = 10 : i32, message = "qd,kd->qk"}> : () -> ()
    %cst_9 = arith.constant dense<0.000000e+00> : vector<5x4xf32>
    %25 = tpu.matmul %22, %23, %cst_9 {dimension_numbers = #tpu.dot_dimension_numbers<[1], [1], [0], [0], [0, 0, 1, 0], [], []>} : vector<5x16xbf16>, vector<4x16xbf16>, vector<5x4xf32> -> vector<5x4xf32>
    "tpu.trace_stop"() : () -> ()
    %cst_10 = arith.constant 2.500000e-01 : f32
    %26 = vector.broadcast %cst_10 : f32 to vector<5x4xf32>
    %27 = arith.mulf %25, %26 : vector<5x4xf32>
    %cst_11 = arith.constant dense<0xFF800000> : vector<5xf32>
    %28 = vector.multi_reduction <maximumf>, %27, %cst_11 [1] : vector<5x4xf32> to vector<5xf32>
    %29 = vector.shape_cast %28 : vector<5xf32> to vector<5x1xf32>
    %30 = vector.broadcast %29 : vector<5x1xf32> to vector<5x4xf32>
    %31 = arith.subf %27, %30 : vector<5x4xf32>
    %32 = math.exp %31 : vector<5x4xf32>
    %cst_12 = arith.constant dense<0.000000e+00> : vector<5xf32>
    %33 = vector.multi_reduction <add>, %32, %cst_12 [1] : vector<5x4xf32> to vector<5xf32>
    %34 = vector.shape_cast %33 : vector<5xf32> to vector<5x1xf32>
    %35 = tpu.reciprocal %34 {approx = true} : vector<5x1xf32> -> vector<5x1xf32>
    %36 = vector.broadcast %35 : vector<5x1xf32> to vector<5x4xf32>
    %37 = arith.mulf %32, %36 : vector<5x4xf32>
    %38 = arith.truncf %37 : vector<5x4xf32> to vector<5x4xbf16>
    %cst_13 = arith.constant dense<0.000000e+00> : vector<5x16xf32>
    %39 = tpu.matmul %38, %24, %cst_13 {dimension_numbers = #tpu.dot_dimension_numbers<[1], [0], [0], [1], [0, 0, 1, 1], [], []>} : vector<5x4xbf16>, vector<4x16xbf16>, vector<5x16xf32> -> vector<5x16xf32>
    %40 = tpu.concatenate %21, %39 in 1 : vector<5x16xf32>, vector<5x16xf32> -> vector<5x32xf32>
    %41 = arith.truncf %40 : vector<5x32xf32> to vector<5x32xbf16>
    %c0_14 = arith.constant 0 : index
    %c0_15 = arith.constant 0 : index
    %c0_16 = arith.constant 0 : index
    %42 = vector.load %arg3[%c0_14, %c0_15, %c0_16] : memref<1x5x32xbf16, #tpu.memory_space<vmem>>, vector<1x5x32xbf16>
    %43 = vector.shape_cast %42 : vector<1x5x32xbf16> to vector<5x32xbf16>
    %44 = vector.shape_cast %41 : vector<5x32xbf16> to vector<1x5x32xbf16>
    tpu.vector_store %arg3[%c0_14, %c0_15, %c0_16], %44 {strides = array<i32>} : memref<1x5x32xbf16, #tpu.memory_space<vmem>>, vector<1x5x32xbf16>,
    return
  }
  func.func @transform_0(%arg0: i32) -> (i32, i32, i32) {
    %c0_i32 = arith.constant 0 : i32
    %c0_i32_0 = arith.constant 0 : i32
    %c0_i32_1 = arith.constant 0 : i32
    return %arg0, %c0_i32, %c0_i32_0 : i32, i32, i32
  }
  func.func @transform_1(%arg0: i32) -> (i32, i32, i32) {
    %c0_i32 = arith.constant 0 : i32
    %c0_i32_0 = arith.constant 0 : i32
    %c0_i32_1 = arith.constant 0 : i32
    return %arg0, %c0_i32, %c0_i32_0 : i32, i32, i32
  }
  func.func @transform_2(%arg0: i32) -> (i32, i32, i32) {
    %c0_i32 = arith.constant 0 : i32
    %c0_i32_0 = arith.constant 0 : i32
    %c0_i32_1 = arith.constant 0 : i32
    return %arg0, %c0_i32, %c0_i32_0 : i32, i32, i32
  }
}

module attributes {stable_mosaic.version = 11 : i64} {
  func.func @_matmul_kernel(%arg0: i32, %arg1: i32, %arg2: i32, %arg3: memref<8x128xbf16, #tpu.memory_space<vmem>>, %arg4: memref<1x128xf32, #tpu.memory_space<vmem>>, %arg5: memref<1x128xf32, #tpu.memory_space<vmem>>, %arg6: memref<128x128xbf16, #tpu.memory_space<vmem>>, %arg7: memref<1x128xf32, #tpu.memory_space<vmem>>, %arg8: memref<8x128xbf16, #tpu.memory_space<vmem>>, %arg9: memref<8x128xf32, #tpu.memory_space<vmem>>) attributes {dimension_semantics = [#tpu.dimension_semantics<parallel>, #tpu.dimension_semantics<parallel>, #tpu.dimension_semantics<arbitrary>], iteration_bounds = array<i64: 1, 1, 1>, scalar_prefetch = 0 : i64, scratch_operands = 1 : i64, tpu.core_type = #tpu.core_type<tc>, window_params = [{transform_indices = @transform_0, window_bounds = array<i64: 8, 128>}, {transform_indices = @transform_1, window_bounds = array<i64: 1, 128>}, {transform_indices = @transform_2, window_bounds = array<i64: 1, 128>}, {transform_indices = @transform_3, window_bounds = array<i64: 128, 128>}, {transform_indices = @transform_4, window_bounds = array<i64: 1, 128>}, {transform_indices = @transform_5, window_bounds = array<i64: 8, 128>}]} {
    %c0_i32 = arith.constant 0 : i32
    %0 = arith.cmpi eq, %arg2, %c0_i32 : i32
    %1 = arith.extui %0 : i1 to i32
    %c0_i32_0 = arith.constant 0 : i32
    %2 = arith.cmpi ne, %1, %c0_i32_0 : i32
    scf.if %2 {
      %cst_19 = arith.constant 0.000000e+00 : f32
      %38 = vector.broadcast %cst_19 : f32 to vector<8x128xf32>
      %c0_20 = arith.constant 0 : index
      %c0_21 = arith.constant 0 : index
      %39 = vector.load %arg9[%c0_20, %c0_21] : memref<8x128xf32, #tpu.memory_space<vmem>>, vector<8x128xf32>
      tpu.vector_store %arg9[%c0_20, %c0_21], %38 {strides = array<i32>} : memref<8x128xf32, #tpu.memory_space<vmem>>, vector<8x128xf32>,
    } else {
    }
    %c0 = arith.constant 0 : index
    %c0_1 = arith.constant 0 : index
    %3 = vector.load %arg3[%c0, %c0_1] : memref<8x128xbf16, #tpu.memory_space<vmem>>, vector<8x128xbf16>
    %4 = arith.extf %3 : vector<8x128xbf16> to vector<8x128xf32>
    %cst = arith.constant dense<0.000000e+00> : vector<8xf32>
    %5 = vector.multi_reduction <add>, %4, %cst [1] : vector<8x128xf32> to vector<8xf32>
    %6 = vector.shape_cast %5 : vector<8xf32> to vector<8x1xf32>
    %cst_2 = arith.constant 3.125000e-02 : f32
    %7 = vector.broadcast %cst_2 : f32 to vector<8x1xf32>
    %8 = arith.mulf %6, %7 : vector<8x1xf32>
    %9 = arith.mulf %4, %4 : vector<8x128xf32>
    %cst_3 = arith.constant dense<0.000000e+00> : vector<8xf32>
    %10 = vector.multi_reduction <add>, %9, %cst_3 [1] : vector<8x128xf32> to vector<8xf32>
    %11 = vector.shape_cast %10 : vector<8xf32> to vector<8x1xf32>
    %cst_4 = arith.constant 3.125000e-02 : f32
    %12 = vector.broadcast %cst_4 : f32 to vector<8x1xf32>
    %13 = arith.mulf %11, %12 : vector<8x1xf32>
    %14 = arith.mulf %8, %8 : vector<8x1xf32>
    %15 = arith.subf %13, %14 : vector<8x1xf32>
    %cst_5 = arith.constant 9.99999974E-6 : f32
    %16 = vector.broadcast %cst_5 : f32 to vector<8x1xf32>
    %17 = arith.addf %15, %16 : vector<8x1xf32>
    %18 = math.rsqrt %17 : vector<8x1xf32>
    %19 = vector.broadcast %8 : vector<8x1xf32> to vector<8x128xf32>
    %20 = arith.subf %4, %19 : vector<8x128xf32>
    %21 = vector.broadcast %18 : vector<8x1xf32> to vector<8x128xf32>
    %22 = arith.mulf %20, %21 : vector<8x128xf32>
    %c0_6 = arith.constant 0 : index
    %c0_7 = arith.constant 0 : index
    %23 = vector.load %arg4[%c0_6, %c0_7] : memref<1x128xf32, #tpu.memory_space<vmem>>, vector<1x128xf32>
    %24 = vector.broadcast %23 : vector<1x128xf32> to vector<8x128xf32>
    %25 = arith.mulf %22, %24 : vector<8x128xf32>
    %c0_8 = arith.constant 0 : index
    %c0_9 = arith.constant 0 : index
    %26 = vector.load %arg5[%c0_8, %c0_9] : memref<1x128xf32, #tpu.memory_space<vmem>>, vector<1x128xf32>
    %27 = vector.broadcast %26 : vector<1x128xf32> to vector<8x128xf32>
    %28 = arith.addf %25, %27 : vector<8x128xf32>
    %29 = arith.truncf %28 : vector<8x128xf32> to vector<8x128xbf16>
    %c0_10 = arith.constant 0 : index
    %c0_11 = arith.constant 0 : index
    %30 = vector.load %arg9[%c0_10, %c0_11] : memref<8x128xf32, #tpu.memory_space<vmem>>, vector<8x128xf32>
    %c0_12 = arith.constant 0 : index
    %c0_13 = arith.constant 0 : index
    %31 = vector.load %arg6[%c0_12, %c0_13] : memref<128x128xbf16, #tpu.memory_space<vmem>>, vector<128x128xbf16>
    %cst_14 = arith.constant dense<0.000000e+00> : vector<8x128xf32>
    %32 = tpu.matmul %29, %31, %cst_14 {dimension_numbers = #tpu.dot_dimension_numbers<[1], [0], [0], [1], [0, 0, 1, 1], [], []>} : vector<8x128xbf16>, vector<128x128xbf16>, vector<8x128xf32> -> vector<8x128xf32>
    %33 = arith.addf %30, %32 : vector<8x128xf32>
    %c0_15 = arith.constant 0 : index
    %c0_16 = arith.constant 0 : index
    %34 = vector.load %arg9[%c0_15, %c0_16] : memref<8x128xf32, #tpu.memory_space<vmem>>, vector<8x128xf32>
    tpu.vector_store %arg9[%c0_15, %c0_16], %33 {strides = array<i32>} : memref<8x128xf32, #tpu.memory_space<vmem>>, vector<8x128xf32>,
    %c0_i32_17 = arith.constant 0 : i32
    %35 = arith.cmpi eq, %arg2, %c0_i32_17 : i32
    %36 = arith.extui %35 : i1 to i32
    %c0_i32_18 = arith.constant 0 : i32
    %37 = arith.cmpi ne, %36, %c0_i32_18 : i32
    scf.if %37 {
      %c0_19 = arith.constant 0 : index
      %c0_20 = arith.constant 0 : index
      %38 = vector.load %arg9[%c0_19, %c0_20] : memref<8x128xf32, #tpu.memory_space<vmem>>, vector<8x128xf32>
      %c0_21 = arith.constant 0 : index
      %c0_22 = arith.constant 0 : index
      %39 = vector.load %arg7[%c0_21, %c0_22] : memref<1x128xf32, #tpu.memory_space<vmem>>, vector<1x128xf32>
      %40 = vector.broadcast %39 : vector<1x128xf32> to vector<8x128xf32>
      %41 = arith.addf %38, %40 : vector<8x128xf32>
      %42 = arith.truncf %41 : vector<8x128xf32> to vector<8x128xbf16>
      %c0_23 = arith.constant 0 : index
      %c0_24 = arith.constant 0 : index
      %43 = vector.load %arg8[%c0_23, %c0_24] : memref<8x128xbf16, #tpu.memory_space<vmem>>, vector<8x128xbf16>
      tpu.vector_store %arg8[%c0_23, %c0_24], %42 {strides = array<i32>} : memref<8x128xbf16, #tpu.memory_space<vmem>>, vector<8x128xbf16>,
    } else {
    }
    return
  }
  func.func @transform_0(%arg0: i32, %arg1: i32, %arg2: i32) -> (i32, i32) {
    %c0_i32 = arith.constant 0 : i32
    return %arg0, %arg2 : i32, i32
  }
  func.func @transform_1(%arg0: i32, %arg1: i32, %arg2: i32) -> (i32, i32) {
    %c0_i32 = arith.constant 0 : i32
    %c0_i32_0 = arith.constant 0 : i32
    return %c0_i32, %arg2 : i32, i32
  }
  func.func @transform_2(%arg0: i32, %arg1: i32, %arg2: i32) -> (i32, i32) {
    %c0_i32 = arith.constant 0 : i32
    %c0_i32_0 = arith.constant 0 : i32
    return %c0_i32, %arg2 : i32, i32
  }
  func.func @transform_3(%arg0: i32, %arg1: i32, %arg2: i32) -> (i32, i32) {
    %c0_i32 = arith.constant 0 : i32
    return %arg2, %arg1 : i32, i32
  }
  func.func @transform_4(%arg0: i32, %arg1: i32, %arg2: i32) -> (i32, i32) {
    %c0_i32 = arith.constant 0 : i32
    %c0_i32_0 = arith.constant 0 : i32
    return %c0_i32, %arg1 : i32, i32
  }
  func.func @transform_5(%arg0: i32, %arg1: i32, %arg2: i32) -> (i32, i32) {
    %c0_i32 = arith.constant 0 : i32
    return %arg0, %arg1 : i32, i32
  }
}

module attributes {stable_mosaic.version = 11 : i64} {
  func.func @_matmul_kernel(%arg0: i32, %arg1: i32, %arg2: i32, %arg3: memref<16x128xbf16, #tpu.memory_space<vmem>>, %arg4: memref<128x128xbf16, #tpu.memory_space<vmem>>, %arg5: memref<1x128xf32, #tpu.memory_space<vmem>>, %arg6: memref<16x128xbf16, #tpu.memory_space<vmem>>, %arg7: memref<16x128xbf16, #tpu.memory_space<vmem>>, %arg8: memref<16x128xf32, #tpu.memory_space<vmem>>) attributes {dimension_semantics = [#tpu.dimension_semantics<parallel>, #tpu.dimension_semantics<parallel>, #tpu.dimension_semantics<arbitrary>], iteration_bounds = array<i64: 1, 1, 1>, scalar_prefetch = 0 : i64, scratch_operands = 1 : i64, tpu.core_type = #tpu.core_type<tc>, window_params = [{transform_indices = @transform_0, window_bounds = array<i64: 16, 128>}, {transform_indices = @transform_1, window_bounds = array<i64: 128, 128>}, {transform_indices = @transform_2, window_bounds = array<i64: 1, 128>}, {transform_indices = @transform_3, window_bounds = array<i64: 16, 128>}, {transform_indices = @transform_4, window_bounds = array<i64: 16, 128>}]} {
    %c0_i32 = arith.constant 0 : i32
    %0 = arith.cmpi eq, %arg2, %c0_i32 : i32
    %1 = arith.extui %0 : i1 to i32
    %c0_i32_0 = arith.constant 0 : i32
    %2 = arith.cmpi ne, %1, %c0_i32_0 : i32
    scf.if %2 {
      %cst_10 = arith.constant 0.000000e+00 : f32
      %12 = vector.broadcast %cst_10 : f32 to vector<16x128xf32>
      %c0_11 = arith.constant 0 : index
      %c0_12 = arith.constant 0 : index
      %13 = vector.load %arg8[%c0_11, %c0_12] : memref<16x128xf32, #tpu.memory_space<vmem>>, vector<16x128xf32>
      tpu.vector_store %arg8[%c0_11, %c0_12], %12 {strides = array<i32>} : memref<16x128xf32, #tpu.memory_space<vmem>>, vector<16x128xf32>,
    } else {
    }
    %c0 = arith.constant 0 : index
    %c0_1 = arith.constant 0 : index
    %3 = vector.load %arg3[%c0, %c0_1] : memref<16x128xbf16, #tpu.memory_space<vmem>>, vector<16x128xbf16>
    %c0_2 = arith.constant 0 : index
    %c0_3 = arith.constant 0 : index
    %4 = vector.load %arg8[%c0_2, %c0_3] : memref<16x128xf32, #tpu.memory_space<vmem>>, vector<16x128xf32>
    %c0_4 = arith.constant 0 : index
    %c0_5 = arith.constant 0 : index
    %5 = vector.load %arg4[%c0_4, %c0_5] : memref<128x128xbf16, #tpu.memory_space<vmem>>, vector<128x128xbf16>
    %cst = arith.constant dense<0.000000e+00> : vector<16x128xf32>
    %6 = tpu.matmul %3, %5, %cst {dimension_numbers = #tpu.dot_dimension_numbers<[1], [0], [0], [1], [0, 0, 1, 1], [], []>} : vector<16x128xbf16>, vector<128x128xbf16>, vector<16x128xf32> -> vector<16x128xf32>
    %7 = arith.addf %4, %6 : vector<16x128xf32>
    %c0_6 = arith.constant 0 : index
    %c0_7 = arith.constant 0 : index
    %8 = vector.load %arg8[%c0_6, %c0_7] : memref<16x128xf32, #tpu.memory_space<vmem>>, vector<16x128xf32>
    tpu.vector_store %arg8[%c0_6, %c0_7], %7 {strides = array<i32>} : memref<16x128xf32, #tpu.memory_space<vmem>>, vector<16x128xf32>,
    %c0_i32_8 = arith.constant 0 : i32
    %9 = arith.cmpi eq, %arg2, %c0_i32_8 : i32
    %10 = arith.extui %9 : i1 to i32
    %c0_i32_9 = arith.constant 0 : i32
    %11 = arith.cmpi ne, %10, %c0_i32_9 : i32
    scf.if %11 {
      %c0_10 = arith.constant 0 : index
      %c0_11 = arith.constant 0 : index
      %12 = vector.load %arg8[%c0_10, %c0_11] : memref<16x128xf32, #tpu.memory_space<vmem>>, vector<16x128xf32>
      %c0_12 = arith.constant 0 : index
      %c0_13 = arith.constant 0 : index
      %13 = vector.load %arg5[%c0_12, %c0_13] : memref<1x128xf32, #tpu.memory_space<vmem>>, vector<1x128xf32>
      %14 = vector.broadcast %13 : vector<1x128xf32> to vector<16x128xf32>
      %15 = arith.addf %12, %14 : vector<16x128xf32>
      %c0_14 = arith.constant 0 : index
      %c0_15 = arith.constant 0 : index
      %16 = vector.load %arg6[%c0_14, %c0_15] : memref<16x128xbf16, #tpu.memory_space<vmem>>, vector<16x128xbf16>
      %17 = arith.extf %16 : vector<16x128xbf16> to vector<16x128xf32>
      %18 = arith.addf %15, %17 : vector<16x128xf32>
      %19 = arith.truncf %18 : vector<16x128xf32> to vector<16x128xbf16>
      %c0_16 = arith.constant 0 : index
      %c0_17 = arith.constant 0 : index
      %20 = vector.load %arg7[%c0_16, %c0_17] : memref<16x128xbf16, #tpu.memory_space<vmem>>, vector<16x128xbf16>
      tpu.vector_store %arg7[%c0_16, %c0_17], %19 {strides = array<i32>} : memref<16x128xbf16, #tpu.memory_space<vmem>>, vector<16x128xbf16>,
    } else {
    }
    return
  }
  func.func @transform_0(%arg0: i32, %arg1: i32, %arg2: i32) -> (i32, i32) {
    %c0_i32 = arith.constant 0 : i32
    return %arg0, %arg2 : i32, i32
  }
  func.func @transform_1(%arg0: i32, %arg1: i32, %arg2: i32) -> (i32, i32) {
    %c0_i32 = arith.constant 0 : i32
    return %arg2, %arg1 : i32, i32
  }
  func.func @transform_2(%arg0: i32, %arg1: i32, %arg2: i32) -> (i32, i32) {
    %c0_i32 = arith.constant 0 : i32
    %c0_i32_0 = arith.constant 0 : i32
    return %c0_i32, %arg1 : i32, i32
  }
  func.func @transform_3(%arg0: i32, %arg1: i32, %arg2: i32) -> (i32, i32) {
    %c0_i32 = arith.constant 0 : i32
    return %arg0, %arg1 : i32, i32
  }
  func.func @transform_4(%arg0: i32, %arg1: i32, %arg2: i32) -> (i32, i32) {
    %c0_i32 = arith.constant 0 : i32
    return %arg0, %arg1 : i32, i32
  }
}

module attributes {stable_mosaic.version = 11 : i64} {
  func.func @_matmul_kernel(%arg0: i32, %arg1: i32, %arg2: i32, %arg3: memref<16x128xbf16, #tpu.memory_space<vmem>>, %arg4: memref<1x128xf32, #tpu.memory_space<vmem>>, %arg5: memref<1x128xf32, #tpu.memory_space<vmem>>, %arg6: memref<128x128xbf16, #tpu.memory_space<vmem>>, %arg7: memref<1x128xf32, #tpu.memory_space<vmem>>, %arg8: memref<16x128xbf16, #tpu.memory_space<vmem>>, %arg9: memref<16x128xf32, #tpu.memory_space<vmem>>) attributes {dimension_semantics = [#tpu.dimension_semantics<parallel>, #tpu.dimension_semantics<parallel>, #tpu.dimension_semantics<arbitrary>], iteration_bounds = array<i64: 1, 1, 1>, scalar_prefetch = 0 : i64, scratch_operands = 1 : i64, tpu.core_type = #tpu.core_type<tc>, window_params = [{transform_indices = @transform_0, window_bounds = array<i64: 16, 128>}, {transform_indices = @transform_1, window_bounds = array<i64: 1, 128>}, {transform_indices = @transform_2, window_bounds = array<i64: 1, 128>}, {transform_indices = @transform_3, window_bounds = array<i64: 128, 128>}, {transform_indices = @transform_4, window_bounds = array<i64: 1, 128>}, {transform_indices = @transform_5, window_bounds = array<i64: 16, 128>}]} {
    %c0_i32 = arith.constant 0 : i32
    %0 = arith.cmpi eq, %arg2, %c0_i32 : i32
    %1 = arith.extui %0 : i1 to i32
    %c0_i32_0 = arith.constant 0 : i32
    %2 = arith.cmpi ne, %1, %c0_i32_0 : i32
    scf.if %2 {
      %cst_19 = arith.constant 0.000000e+00 : f32
      %38 = vector.broadcast %cst_19 : f32 to vector<16x128xf32>
      %c0_20 = arith.constant 0 : index
      %c0_21 = arith.constant 0 : index
      %39 = vector.load %arg9[%c0_20, %c0_21] : memref<16x128xf32, #tpu.memory_space<vmem>>, vector<16x128xf32>
      tpu.vector_store %arg9[%c0_20, %c0_21], %38 {strides = array<i32>} : memref<16x128xf32, #tpu.memory_space<vmem>>, vector<16x128xf32>,
    } else {
    }
    %c0 = arith.constant 0 : index
    %c0_1 = arith.constant 0 : index
    %3 = vector.load %arg3[%c0, %c0_1] : memref<16x128xbf16, #tpu.memory_space<vmem>>, vector<16x128xbf16>
    %4 = arith.extf %3 : vector<16x128xbf16> to vector<16x128xf32>
    %cst = arith.constant dense<0.000000e+00> : vector<16xf32>
    %5 = vector.multi_reduction <add>, %4, %cst [1] : vector<16x128xf32> to vector<16xf32>
    %6 = vector.shape_cast %5 : vector<16xf32> to vector<16x1xf32>
    %cst_2 = arith.constant 3.125000e-02 : f32
    %7 = vector.broadcast %cst_2 : f32 to vector<16x1xf32>
    %8 = arith.mulf %6, %7 : vector<16x1xf32>
    %9 = arith.mulf %4, %4 : vector<16x128xf32>
    %cst_3 = arith.constant dense<0.000000e+00> : vector<16xf32>
    %10 = vector.multi_reduction <add>, %9, %cst_3 [1] : vector<16x128xf32> to vector<16xf32>
    %11 = vector.shape_cast %10 : vector<16xf32> to vector<16x1xf32>
    %cst_4 = arith.constant 3.125000e-02 : f32
    %12 = vector.broadcast %cst_4 : f32 to vector<16x1xf32>
    %13 = arith.mulf %11, %12 : vector<16x1xf32>
    %14 = arith.mulf %8, %8 : vector<16x1xf32>
    %15 = arith.subf %13, %14 : vector<16x1xf32>
    %cst_5 = arith.constant 9.99999974E-6 : f32
    %16 = vector.broadcast %cst_5 : f32 to vector<16x1xf32>
    %17 = arith.addf %15, %16 : vector<16x1xf32>
    %18 = math.rsqrt %17 : vector<16x1xf32>
    %19 = vector.broadcast %8 : vector<16x1xf32> to vector<16x128xf32>
    %20 = arith.subf %4, %19 : vector<16x128xf32>
    %21 = vector.broadcast %18 : vector<16x1xf32> to vector<16x128xf32>
    %22 = arith.mulf %20, %21 : vector<16x128xf32>
    %c0_6 = arith.constant 0 : index
    %c0_7 = arith.constant 0 : index
    %23 = vector.load %arg4[%c0_6, %c0_7] : memref<1x128xf32, #tpu.memory_space<vmem>>, vector<1x128xf32>
    %24 = vector.broadcast %23 : vector<1x128xf32> to vector<16x128xf32>
    %25 = arith.mulf %22, %24 : vector<16x128xf32>
    %c0_8 = arith.constant 0 : index
    %c0_9 = arith.constant 0 : index
    %26 = vector.load %arg5[%c0_8, %c0_9] : memref<1x128xf32, #tpu.memory_space<vmem>>, vector<1x128xf32>
    %27 = vector.broadcast %26 : vector<1x128xf32> to vector<16x128xf32>
    %28 = arith.addf %25, %27 : vector<16x128xf32>
    %29 = arith.truncf %28 : vector<16x128xf32> to vector<16x128xbf16>
    %c0_10 = arith.constant 0 : index
    %c0_11 = arith.constant 0 : index
    %30 = vector.load %arg9[%c0_10, %c0_11] : memref<16x128xf32, #tpu.memory_space<vmem>>, vector<16x128xf32>
    %c0_12 = arith.constant 0 : index
    %c0_13 = arith.constant 0 : index
    %31 = vector.load %arg6[%c0_12, %c0_13] : memref<128x128xbf16, #tpu.memory_space<vmem>>, vector<128x128xbf16>
    %cst_14 = arith.constant dense<0.000000e+00> : vector<16x128xf32>
    %32 = tpu.matmul %29, %31, %cst_14 {dimension_numbers = #tpu.dot_dimension_numbers<[1], [0], [0], [1], [0, 0, 1, 1], [], []>} : vector<16x128xbf16>, vector<128x128xbf16>, vector<16x128xf32> -> vector<16x128xf32>
    %33 = arith.addf %30, %32 : vector<16x128xf32>
    %c0_15 = arith.constant 0 : index
    %c0_16 = arith.constant 0 : index
    %34 = vector.load %arg9[%c0_15, %c0_16] : memref<16x128xf32, #tpu.memory_space<vmem>>, vector<16x128xf32>
    tpu.vector_store %arg9[%c0_15, %c0_16], %33 {strides = array<i32>} : memref<16x128xf32, #tpu.memory_space<vmem>>, vector<16x128xf32>,
    %c0_i32_17 = arith.constant 0 : i32
    %35 = arith.cmpi eq, %arg2, %c0_i32_17 : i32
    %36 = arith.extui %35 : i1 to i32
    %c0_i32_18 = arith.constant 0 : i32
    %37 = arith.cmpi ne, %36, %c0_i32_18 : i32
    scf.if %37 {
      %c0_19 = arith.constant 0 : index
      %c0_20 = arith.constant 0 : index
      %38 = vector.load %arg9[%c0_19, %c0_20] : memref<16x128xf32, #tpu.memory_space<vmem>>, vector<16x128xf32>
      %c0_21 = arith.constant 0 : index
      %c0_22 = arith.constant 0 : index
      %39 = vector.load %arg7[%c0_21, %c0_22] : memref<1x128xf32, #tpu.memory_space<vmem>>, vector<1x128xf32>
      %40 = vector.broadcast %39 : vector<1x128xf32> to vector<16x128xf32>
      %41 = arith.addf %38, %40 : vector<16x128xf32>
      %cst_23 = arith.constant 0.707106769 : f32
      %42 = vector.broadcast %cst_23 : f32 to vector<16x128xf32>
      %43 = arith.mulf %41, %42 : vector<16x128xf32>
      %44 = math.absf %43 : vector<16x128xf32>
      %cst_24 = arith.constant 0.327591091 : f32
      %45 = vector.broadcast %cst_24 : f32 to vector<16x128xf32>
      %46 = arith.mulf %45, %44 : vector<16x128xf32>
      %cst_25 = arith.constant 1.000000e+00 : f32
      %47 = vector.broadcast %cst_25 : f32 to vector<16x128xf32>
      %48 = arith.addf %47, %46 : vector<16x128xf32>
      %49 = tpu.reciprocal %48 {approx = true} : vector<16x128xf32> -> vector<16x128xf32>
      %cst_26 = arith.constant 1.06140542 : f32
      %50 = vector.broadcast %cst_26 : f32 to vector<16x128xf32>
      %51 = arith.mulf %50, %49 : vector<16x128xf32>
      %cst_27 = arith.constant -1.45315206 : f32
      %52 = vector.broadcast %cst_27 : f32 to vector<16x128xf32>
      %53 = arith.addf %51, %52 : vector<16x128xf32>
      %54 = arith.mulf %53, %49 : vector<16x128xf32>
      %cst_28 = arith.constant 1.42141378 : f32
      %55 = vector.broadcast %cst_28 : f32 to vector<16x128xf32>
      %56 = arith.addf %54, %55 : vector<16x128xf32>
      %57 = arith.mulf %56, %49 : vector<16x128xf32>
      %cst_29 = arith.constant -0.284496725 : f32
      %58 = vector.broadcast %cst_29 : f32 to vector<16x128xf32>
      %59 = arith.addf %57, %58 : vector<16x128xf32>
      %60 = arith.mulf %59, %49 : vector<16x128xf32>
      %cst_30 = arith.constant 0.254829586 : f32
      %61 = vector.broadcast %cst_30 : f32 to vector<16x128xf32>
      %62 = arith.addf %60, %61 : vector<16x128xf32>
      %63 = arith.mulf %62, %49 : vector<16x128xf32>
      %cst_31 = arith.constant 0.000000e+00 : f32
      %64 = vector.broadcast %cst_31 : f32 to vector<16x128xf32>
      %65 = arith.subf %64, %44 : vector<16x128xf32>
      %66 = arith.mulf %65, %44 : vector<16x128xf32>
      %67 = math.exp %66 : vector<16x128xf32>
      %68 = arith.mulf %63, %67 : vector<16x128xf32>
      %cst_32 = arith.constant 1.000000e+00 : f32
      %69 = vector.broadcast %cst_32 : f32 to vector<16x128xf32>
      %70 = arith.subf %69, %68 : vector<16x128xf32>
      %cst_33 = arith.constant 0.000000e+00 : f32
      %71 = vector.broadcast %cst_33 : f32 to vector<16x128xf32>
      %72 = arith.cmpf oge, %43, %71 : vector<16x128xf32>
      %cst_34 = arith.constant 0.000000e+00 : f32
      %73 = vector.broadcast %cst_34 : f32 to vector<16x128xf32>
      %74 = arith.subf %73, %70 : vector<16x128xf32>
      %75 = arith.select %72, %70, %74 : vector<16x128xi1>, vector<16x128xf32>
      %cst_35 = arith.constant 5.000000e-01 : f32
      %76 = vector.broadcast %cst_35 : f32 to vector<16x128xf32>
      %77 = arith.mulf %76, %41 : vector<16x128xf32>
      %cst_36 = arith.constant 1.000000e+00 : f32
      %78 = vector.broadcast %cst_36 : f32 to vector<16x128xf32>
      %79 = arith.addf %78, %75 : vector<16x128xf32>
      %80 = arith.mulf %77, %79 : vector<16x128xf32>
      %81 = arith.truncf %80 : vector<16x128xf32> to vector<16x128xbf16>
      %c0_37 = arith.constant 0 : index
      %c0_38 = arith.constant 0 : index
      %82 = vector.load %arg8[%c0_37, %c0_38] : memref<16x128xbf16, #tpu.memory_space<vmem>>, vector<16x128xbf16>
      tpu.vector_store %arg8[%c0_37, %c0_38], %81 {strides = array<i32>} : memref<16x128xbf16, #tpu.memory_space<vmem>>, vector<16x128xbf16>,
    } else {
    }
    return
  }
  func.func @transform_0(%arg0: i32, %arg1: i32, %arg2: i32) -> (i32, i32) {
    %c0_i32 = arith.constant 0 : i32
    return %arg0, %arg2 : i32, i32
  }
  func.func @transform_1(%arg0: i32, %arg1: i32, %arg2: i32) -> (i32, i32) {
    %c0_i32 = arith.constant 0 : i32
    %c0_i32_0 = arith.constant 0 : i32
    return %c0_i32, %arg2 : i32, i32
  }
  func.func @transform_2(%arg0: i32, %arg1: i32, %arg2: i32) -> (i32, i32) {
    %c0_i32 = arith.constant 0 : i32
    %c0_i32_0 = arith.constant 0 : i32
    return %c0_i32, %arg2 : i32, i32
  }
  func.func @transform_3(%arg0: i32, %arg1: i32, %arg2: i32) -> (i32, i32) {
    %c0_i32 = arith.constant 0 : i32
    return %arg2, %arg1 : i32, i32
  }
  func.func @transform_4(%arg0: i32, %arg1: i32, %arg2: i32) -> (i32, i32) {
    %c0_i32 = arith.constant 0 : i32
    %c0_i32_0 = arith.constant 0 : i32
    return %c0_i32, %arg1 : i32, i32
  }
  func.func @transform_5(%arg0: i32, %arg1: i32, %arg2: i32) -> (i32, i32) {
    %c0_i32 = arith.constant 0 : i32
    return %arg0, %arg1 : i32, i32
  }
}

module attributes {stable_mosaic.version = 11 : i64} {
  func.func @_matmul_kernel(%arg0: i32, %arg1: i32, %arg2: i32, %arg3: memref<8x128xbf16, #tpu.memory_space<vmem>>, %arg4: memref<1x128xf32, #tpu.memory_space<vmem>>, %arg5: memref<1x128xf32, #tpu.memory_space<vmem>>, %arg6: memref<128x128xbf16, #tpu.memory_space<vmem>>, %arg7: memref<1x128xf32, #tpu.memory_space<vmem>>, %arg8: memref<8x128xf32, #tpu.memory_space<vmem>>, %arg9: memref<8x128xf32, #tpu.memory_space<vmem>>) attributes {dimension_semantics = [#tpu.dimension_semantics<parallel>, #tpu.dimension_semantics<parallel>, #tpu.dimension_semantics<arbitrary>], iteration_bounds = array<i64: 1, 1, 1>, scalar_prefetch = 0 : i64, scratch_operands = 1 : i64, tpu.core_type = #tpu.core_type<tc>, window_params = [{transform_indices = @transform_0, window_bounds = array<i64: 8, 128>}, {transform_indices = @transform_1, window_bounds = array<i64: 1, 128>}, {transform_indices = @transform_2, window_bounds = array<i64: 1, 128>}, {transform_indices = @transform_3, window_bounds = array<i64: 128, 128>}, {transform_indices = @transform_4, window_bounds = array<i64: 1, 128>}, {transform_indices = @transform_5, window_bounds = array<i64: 8, 128>}]} {
    %c0_i32 = arith.constant 0 : i32
    %0 = arith.cmpi eq, %arg2, %c0_i32 : i32
    %1 = arith.extui %0 : i1 to i32
    %c0_i32_0 = arith.constant 0 : i32
    %2 = arith.cmpi ne, %1, %c0_i32_0 : i32
    scf.if %2 {
      %cst_19 = arith.constant 0.000000e+00 : f32
      %38 = vector.broadcast %cst_19 : f32 to vector<8x128xf32>
      %c0_20 = arith.constant 0 : index
      %c0_21 = arith.constant 0 : index
      %39 = vector.load %arg9[%c0_20, %c0_21] : memref<8x128xf32, #tpu.memory_space<vmem>>, vector<8x128xf32>
      tpu.vector_store %arg9[%c0_20, %c0_21], %38 {strides = array<i32>} : memref<8x128xf32, #tpu.memory_space<vmem>>, vector<8x128xf32>,
    } else {
    }
    %c0 = arith.constant 0 : index
    %c0_1 = arith.constant 0 : index
    %3 = vector.load %arg3[%c0, %c0_1] : memref<8x128xbf16, #tpu.memory_space<vmem>>, vector<8x128xbf16>
    %4 = arith.extf %3 : vector<8x128xbf16> to vector<8x128xf32>
    %cst = arith.constant dense<0.000000e+00> : vector<8xf32>
    %5 = vector.multi_reduction <add>, %4, %cst [1] : vector<8x128xf32> to vector<8xf32>
    %6 = vector.shape_cast %5 : vector<8xf32> to vector<8x1xf32>
    %cst_2 = arith.constant 3.125000e-02 : f32
    %7 = vector.broadcast %cst_2 : f32 to vector<8x1xf32>
    %8 = arith.mulf %6, %7 : vector<8x1xf32>
    %9 = arith.mulf %4, %4 : vector<8x128xf32>
    %cst_3 = arith.constant dense<0.000000e+00> : vector<8xf32>
    %10 = vector.multi_reduction <add>, %9, %cst_3 [1] : vector<8x128xf32> to vector<8xf32>
    %11 = vector.shape_cast %10 : vector<8xf32> to vector<8x1xf32>
    %cst_4 = arith.constant 3.125000e-02 : f32
    %12 = vector.broadcast %cst_4 : f32 to vector<8x1xf32>
    %13 = arith.mulf %11, %12 : vector<8x1xf32>
    %14 = arith.mulf %8, %8 : vector<8x1xf32>
    %15 = arith.subf %13, %14 : vector<8x1xf32>
    %cst_5 = arith.constant 9.99999974E-6 : f32
    %16 = vector.broadcast %cst_5 : f32 to vector<8x1xf32>
    %17 = arith.addf %15, %16 : vector<8x1xf32>
    %18 = math.rsqrt %17 : vector<8x1xf32>
    %19 = vector.broadcast %8 : vector<8x1xf32> to vector<8x128xf32>
    %20 = arith.subf %4, %19 : vector<8x128xf32>
    %21 = vector.broadcast %18 : vector<8x1xf32> to vector<8x128xf32>
    %22 = arith.mulf %20, %21 : vector<8x128xf32>
    %c0_6 = arith.constant 0 : index
    %c0_7 = arith.constant 0 : index
    %23 = vector.load %arg4[%c0_6, %c0_7] : memref<1x128xf32, #tpu.memory_space<vmem>>, vector<1x128xf32>
    %24 = vector.broadcast %23 : vector<1x128xf32> to vector<8x128xf32>
    %25 = arith.mulf %22, %24 : vector<8x128xf32>
    %c0_8 = arith.constant 0 : index
    %c0_9 = arith.constant 0 : index
    %26 = vector.load %arg5[%c0_8, %c0_9] : memref<1x128xf32, #tpu.memory_space<vmem>>, vector<1x128xf32>
    %27 = vector.broadcast %26 : vector<1x128xf32> to vector<8x128xf32>
    %28 = arith.addf %25, %27 : vector<8x128xf32>
    %29 = arith.truncf %28 : vector<8x128xf32> to vector<8x128xbf16>
    %c0_10 = arith.constant 0 : index
    %c0_11 = arith.constant 0 : index
    %30 = vector.load %arg9[%c0_10, %c0_11] : memref<8x128xf32, #tpu.memory_space<vmem>>, vector<8x128xf32>
    %c0_12 = arith.constant 0 : index
    %c0_13 = arith.constant 0 : index
    %31 = vector.load %arg6[%c0_12, %c0_13] : memref<128x128xbf16, #tpu.memory_space<vmem>>, vector<128x128xbf16>
    %cst_14 = arith.constant dense<0.000000e+00> : vector<8x128xf32>
    %32 = tpu.matmul %29, %31, %cst_14 {dimension_numbers = #tpu.dot_dimension_numbers<[1], [0], [0], [1], [0, 0, 1, 1], [], []>} : vector<8x128xbf16>, vector<128x128xbf16>, vector<8x128xf32> -> vector<8x128xf32>
    %33 = arith.addf %30, %32 : vector<8x128xf32>
    %c0_15 = arith.constant 0 : index
    %c0_16 = arith.constant 0 : index
    %34 = vector.load %arg9[%c0_15, %c0_16] : memref<8x128xf32, #tpu.memory_space<vmem>>, vector<8x128xf32>
    tpu.vector_store %arg9[%c0_15, %c0_16], %33 {strides = array<i32>} : memref<8x128xf32, #tpu.memory_space<vmem>>, vector<8x128xf32>,
    %c0_i32_17 = arith.constant 0 : i32
    %35 = arith.cmpi eq, %arg2, %c0_i32_17 : i32
    %36 = arith.extui %35 : i1 to i32
    %c0_i32_18 = arith.constant 0 : i32
    %37 = arith.cmpi ne, %36, %c0_i32_18 : i32
    scf.if %37 {
      %c0_19 = arith.constant 0 : index
      %c0_20 = arith.constant 0 : index
      %38 = vector.load %arg9[%c0_19, %c0_20] : memref<8x128xf32, #tpu.memory_space<vmem>>, vector<8x128xf32>
      %c0_21 = arith.constant 0 : index
      %c0_22 = arith.constant 0 : index
      %39 = vector.load %arg7[%c0_21, %c0_22] : memref<1x128xf32, #tpu.memory_space<vmem>>, vector<1x128xf32>
      %40 = vector.broadcast %39 : vector<1x128xf32> to vector<8x128xf32>
      %41 = arith.addf %38, %40 : vector<8x128xf32>
      %c0_23 = arith.constant 0 : index
      %c0_24 = arith.constant 0 : index
      %42 = vector.load %arg8[%c0_23, %c0_24] : memref<8x128xf32, #tpu.memory_space<vmem>>, vector<8x128xf32>
      tpu.vector_store %arg8[%c0_23, %c0_24], %41 {strides = array<i32>} : memref<8x128xf32, #tpu.memory_space<vmem>>, vector<8x128xf32>,
    } else {
    }
    return
  }
  func.func @transform_0(%arg0: i32, %arg1: i32, %arg2: i32) -> (i32, i32) {
    %c0_i32 = arith.constant 0 : i32
    return %arg0, %arg2 : i32, i32
  }
  func.func @transform_1(%arg0: i32, %arg1: i32, %arg2: i32) -> (i32, i32) {
    %c0_i32 = arith.constant 0 : i32
    %c0_i32_0 = arith.constant 0 : i32
    return %c0_i32, %arg2 : i32, i32
  }
  func.func @transform_2(%arg0: i32, %arg1: i32, %arg2: i32) -> (i32, i32) {
    %c0_i32 = arith.constant 0 : i32
    %c0_i32_0 = arith.constant 0 : i32
    return %c0_i32, %arg2 : i32, i32
  }
  func.func @transform_3(%arg0: i32, %arg1: i32, %arg2: i32) -> (i32, i32) {
    %c0_i32 = arith.constant 0 : i32
    return %arg2, %arg1 : i32, i32
  }
  func.func @transform_4(%arg0: i32, %arg1: i32, %arg2: i32) -> (i32, i32) {
    %c0_i32 = arith.constant 0 : i32
    %c0_i32_0 = arith.constant 0 : i32
    return %c0_i32, %arg1 : i32, i32
  }
  func.func @transform_5(%arg0: i32, %arg1: i32, %arg2: i32) -> (i32, i32) {
    %c0_i32 = arith.constant 0 : i32
    return %arg0, %arg1 : i32, i32
  }
}

</mosaic_0001>

<llo_original>
// kernel: salclass_forward.17
$region0: #{salclass_forward.17}
  #allocation0 [shape = 'u32[]', space=smem, size = 0x4, offset = 0x4, fixed_abs, tag = 'smem constant byte address 0x4 - core index']
  #allocation1 [shape = 'u32[144,128]{1,0:T(1,128)}', space=vmem, size = 0x12000, scoped, tag = 'internal scratch']
  #allocation2 [shape = 'f32[16,128]{1,0:T(8,128)}', space=vmem, size = 0x2000, scoped, tag = 'scratch operand']
  %s0 = inlined_call_operand.vmem [shape: bf16[16,128], index: 0, kind: input, shape index: {}]
  %s1 = inlined_call_operand.vmem [shape: f32[1,128], index: 1, kind: input, shape index: {}]
  %s2 = inlined_call_operand.vmem [shape: f32[1,128], index: 2, kind: input, shape index: {}]
  %s3 = inlined_call_operand.vmem [shape: bf16[128,128], index: 3, kind: input, shape index: {}]
  %s4 = inlined_call_operand.vmem [shape: f32[1,128], index: 4, kind: input, shape index: {}]
  %s5 = inlined_call_operand.vmem [shape: bf16[16,128], index: 5, kind: output, shape index: {}]
  %s6 = sld [smem:[#allocation0]]
  $region38: #{salclass_forward.17} parent=0
    _
  %s8 = ssub.s32 1, %s6
  %s9 = scalar_select 0, %s8, %s6
  // Predicated region
  $region2: #{salclass_forward.17} parent=0 // pred_check
    _
  $region3: #{salclass_forward.17} parent=0 // pred_check_branch
    %11 = sbr.rel (0) target = $region5
  $region4: #{salclass_forward.17} parent=0 // pred_region
    _
  $region5: #{salclass_forward.17} parent=0 // pred_fallthru
    _
  // Predicated region
  $region6: #{salclass_forward.17} parent=0 // pred_check
    _
  $region7: #{salclass_forward.17} parent=0 // pred_check_branch
    %13 = sbr.rel (0) target = $region9
  $region8: #{salclass_forward.17} parent=0 // pred_region
    _
  $region9: #{salclass_forward.17} parent=0 // pred_fallthru
    _
  // Predicated region
  $region10: #{salclass_forward.17} parent=0 // pred_check
    _
  $region11: #{salclass_forward.17} parent=0 // pred_check_branch
    %15 = sbr.rel (0) target = $region13
  $region12: #{salclass_forward.17} parent=0 // pred_region
    _
  $region13: #{salclass_forward.17} parent=0 // pred_fallthru
    _
  // Predicated region
  $region14: #{salclass_forward.17} parent=0 // pred_check
    _
  $region15: #{salclass_forward.17} parent=0 // pred_check_branch
    %17 = sbr.rel (0) target = $region17
  $region16: #{salclass_forward.17} parent=0 // pred_region
    _
  $region17: #{salclass_forward.17} parent=0 // pred_fallthru
    _
  // Predicated region
  $region18: #{salclass_forward.17} parent=0 // pred_check
    _
  $region19: #{salclass_forward.17} parent=0 // pred_check_branch
    %19 = sbr.rel (0) target = $region21
  $region20: #{salclass_forward.17} parent=0 // pred_region
    _
  $region21: #{salclass_forward.17} parent=0 // pred_fallthru
    _
  %p21 = scmp.eq.s32.totalorder 0, 0
  // Predicated region
  $region22: #{salclass_forward.17} parent=0 // pred_check
    %p22 = pneg %p21
  $region23: #{salclass_forward.17} parent=0 // pred_check_branch
    %24 = sbr.rel (%p22) target = $region25
  $region24: #{salclass_forward.17} parent=0 // pred_region
    %25 = vst [vmem:[#allocation2] sm:$0xff] 0.0
    %26 = vst [vmem:[#allocation2 + $0x8] sm:$0xff] 0.0
  $region25: #{salclass_forward.17} parent=0 // pred_fallthru
    _
  %v27 = vld [vmem:[%s0] sm:$0xf]
  %v28 = vld [vmem:[%s0 + $0x4] sm:$0xf]
  %v29 = vunpack.c.l.bf16 %v27
  %v30 = vunpack.c.l.bf16 %v28
  %31 = vadd.xlane.f32.xlu0 %v29
  %v32 = vpop.xlane.xlu0 %31
  %33 = vadd.xlane.f32.xlu0 %v30
  %v34 = vpop.xlane.xlu0 %33
  %v35 = vmul.f32 %v32, 0.03125
  %v36 = vmul.f32 %v34, 0.03125
  %v37 = vmul.f32 %v29, %v29
  %v38 = vmul.f32 %v30, %v30
  %39 = vadd.xlane.f32.xlu0 %v37
  %v40 = vpop.xlane.xlu0 %39
  %41 = vadd.xlane.f32.xlu0 %v38
  %v42 = vpop.xlane.xlu0 %41
  %v43 = vmul.f32 %v40, 0.03125
  %v44 = vmul.f32 %v42, 0.03125
  %v45 = vmul.f32 %v35, %v35
  %v46 = vmul.f32 %v36, %v36
  %v47 = vsub.f32 %v43, %v45
  %v48 = vsub.f32 %v44, %v46
  %v49 = vadd.f32 %v47, 1e-05
  %v50 = vadd.f32 %v48, 1e-05
  %v51 = vrsqrt.pop %v49
  %v52 = vrsqrt.pop %v50
  %v53 = vsub.f32 %v29, %v35
  %v54 = vsub.f32 %v30, %v36
  %v55 = vmul.f32 %v53, %v51
  %v56 = vmul.f32 %v54, %v52
  %v57 = vld [vmem:[%s1] sm:$0x1]
  %v59 = vlaneseq
  %v60 = vshrl.u32 %v59, 7
  %v61 = vsub.s32 0, %v60
  %v62 = vrot.slane %v57, %v61
  %v64 = vmul.f32 %v55, %v62
  %v65 = vmul.f32 %v56, %v62
  %v66 = vld [vmem:[%s2] sm:$0x1]
  %v68 = vlaneseq
  %v69 = vshrl.u32 %v68, 7
  %v70 = vsub.s32 0, %v69
  %v71 = vrot.slane %v66, %v70
  %v73 = vadd.f32 %v64, %v71
  %v74 = vadd.f32 %v65, %v71
  %v75 = vpack.c.bf16 %v74, %v73
  %v76 = vld [vmem:[#allocation2] sm:$0xff]
  %v77 = vld [vmem:[#allocation2 + $0x8] sm:$0xff]
  %v78 = vld [vmem:[%s3] sm:$0xf]
  %v79 = vld [vmem:[%s3 + $0x4] sm:$0xf]
  %v80 = vld [vmem:[%s3 + $0x8] sm:$0xf]
  %v81 = vld [vmem:[%s3 + $0xc] sm:$0xf]
  %v82 = vld [vmem:[%s3 + $0x10] sm:$0xf]
  %v83 = vld [vmem:[%s3 + $0x14] sm:$0xf]
  %v84 = vld [vmem:[%s3 + $0x18] sm:$0xf]
  %v85 = vld [vmem:[%s3 + $0x1c] sm:$0xf]
  %v86 = vld [vmem:[%s3 + $0x20] sm:$0xf]
  %v87 = vld [vmem:[%s3 + $0x24] sm:$0xf]
  %v88 = vld [vmem:[%s3 + $0x28] sm:$0xf]
  %v89 = vld [vmem:[%s3 + $0x2c] sm:$0xf]
  %v90 = vld [vmem:[%s3 + $0x30] sm:$0xf]
  %v91 = vld [vmem:[%s3 + $0x34] sm:$0xf]
  %v92 = vld [vmem:[%s3 + $0x38] sm:$0xf]
  %v93 = vld [vmem:[%s3 + $0x3c] sm:$0xf]
  %v110 = vunpack.c.l.b16 %v78
  %v111 = vunpack.c.l.b16 %v79
  %v112 = vunpack.c.l.b16 %v80
  %v113 = vunpack.c.l.b16 %v81
  %v114 = vunpack.c.l.b16 %v82
  %v115 = vunpack.c.l.b16 %v83
  %v116 = vunpack.c.l.b16 %v84
  %v117 = vunpack.c.l.b16 %v85
  %v118 = vunpack.c.l.b16 %v86
  %v119 = vunpack.c.l.b16 %v87
  %v120 = vunpack.c.l.b16 %v88
  %v121 = vunpack.c.l.b16 %v89
  %v122 = vunpack.c.l.b16 %v90
  %v123 = vunpack.c.l.b16 %v91
  %v124 = vunpack.c.l.b16 %v92
  %v125 = vunpack.c.l.b16 %v93
  %v126 = vpack.c.b16 %v111, %v110
  %v127 = vpack.c.b16 %v113, %v112
  %v128 = vpack.c.b16 %v115, %v114
  %v129 = vpack.c.b16 %v117, %v116
  %v130 = vpack.c.b16 %v119, %v118
  %v131 = vpack.c.b16 %v121, %v120
  %v132 = vpack.c.b16 %v123, %v122
  %v133 = vpack.c.b16 %v125, %v124
  %142 = vmatprep.subr.bf16.mxu0 0
  %143 = vmatpush1.bf16.msra.mxu0 %v126
  %144 = vmatprep.subr.bf16.mxu0 0
  %145 = vmatpush1.bf16.msra.mxu0 %v127
  %146 = vmatprep.subr.bf16.mxu0 0
  %147 = vmatpush1.bf16.msra.mxu0 %v128
  %148 = vmatprep.subr.bf16.mxu0 0
  %149 = vmatpush1.bf16.msra.mxu0 %v129
  %150 = vmatprep.subr.bf16.mxu0 0
  %151 = vmatpush1.bf16.msra.mxu0 %v130
  %152 = vmatprep.subr.bf16.mxu0 0
  %153 = vmatpush1.bf16.msra.mxu0 %v131
  %154 = vmatprep.subr.bf16.mxu0 0
  %155 = vmatpush1.bf16.msra.mxu0 %v132
  %156 = vmatprep.subr.bf16.mxu0 0
  %157 = vmatpush1.bf16.msra.mxu0 %v133
  %158 = vmatprep.subr.bf16.mxu0 0
  %159 = vmatpush1.bf16.msra.mxu0 0
  %160 = vmatprep.subr.bf16.mxu0 0
  %161 = vmatpush1.bf16.msra.mxu0 0
  %162 = vmatprep.subr.bf16.mxu0 0
  %163 = vmatpush1.bf16.msra.mxu0 0
  %164 = vmatprep.subr.bf16.mxu0 0
  %165 = vmatpush1.bf16.msra.mxu0 0
  %166 = vmatprep.subr.bf16.mxu0 0
  %167 = vmatpush1.bf16.msra.mxu0 0
  %168 = vmatprep.subr.bf16.mxu0 0
  %169 = vmatpush1.bf16.msra.mxu0 0
  %170 = vmatprep.subr.bf16.mxu0 0
  %171 = vmatpush1.bf16.msra.mxu0 0
  %172 = vmatprep.subr.bf16.mxu0 0
  %173 = vmatpush1.bf16.msra.mxu0 0
  %174 = vmatprep.mubr.bf16.mxu0 0
  %175 = vmatmul.mubr.bf16.gmra.mrb[0].mxu0 %v75
  %v176 = vpop.f32.mrb[0].mxu0
  %v177 = vadd.f32 0.0, %v176
  %v178 = vpop.f32.mrb[0].mxu0
  %v179 = vpop.f32.mrb[0].mxu0
  %v180 = vadd.f32 0.0, %v179
  %v181 = vpop.f32.mrb[0].mxu0
  %182 = vdwg.mxu0
  %v183 = vadd.f32 %v76, %v177
  %v184 = vadd.f32 %v77, %v180
  %185 = vst [vmem:[#allocation2] sm:$0xff] %v183
  %186 = vst [vmem:[#allocation2 + $0x8] sm:$0xff] %v184
  // Predicated region
  $region26: #{salclass_forward.17} parent=0 // pred_check
    %p187 = pneg %p21
  $region27: #{salclass_forward.17} parent=0 // pred_check_branch
    %189 = sbr.rel (%p187) target = $region29
  $region28: #{salclass_forward.17} parent=0 // pred_region
    %v190 = vld [vmem:[#allocation2] sm:$0xff]
    %v191 = vld [vmem:[#allocation2 + $0x8] sm:$0xff]
    %v192 = vld [vmem:[%s4] sm:$0x1]
    %v194 = vlaneseq
    %v195 = vshrl.u32 %v194, 7
    %v196 = vsub.s32 0, %v195
    %v197 = vrot.slane %v192, %v196
    %v199 = vadd.f32 %v190, %v197
    %v200 = vadd.f32 %v191, %v197
    %v201 = vpack.c.bf16 %v200, %v199
    %v203 = vunpack.c.l.b16 %v201
    %v204 = vunpack.c.h.b16 %v201
    %v205 = vpack.c.b16 %v203, %v203
    %v206 = vpack.c.b16 %v204, %v204
    %209 = vst [vmem:[%s5] sm:$0xf] %v205
    %210 = vst [vmem:[%s5 + $0x4] sm:$0xf] %v206
  $region29: #{salclass_forward.17} parent=0 // pred_fallthru
    _
  // Predicated region
  $region30: #{salclass_forward.17} parent=0 // pred_check
    _
  $region31: #{salclass_forward.17} parent=0 // pred_check_branch
    %212 = sbr.rel (0) target = $region33
  $region32: #{salclass_forward.17} parent=0 // pred_region
    _
  $region33: #{salclass_forward.17} parent=0 // pred_fallthru
    _
  // Predicated region
  $region34: #{salclass_forward.17} parent=0 // pred_check
    _
  $region35: #{salclass_forward.17} parent=0 // pred_check_branch
    %214 = sbr.rel (0) target = $region37
  $region36: #{salclass_forward.17} parent=0 // pred_region
    _
  $region37: #{salclass_forward.17} parent=0 // pred_fallthru
    _

// kernel: salclass_forward.15
$region0: #{salclass_forward.15}
  #allocation0 [shape = 'u32[]', space=smem, size = 0x4, offset = 0x4, fixed_abs, tag = 'smem constant byte address 0x4 - core index']
  #allocation1 [shape = 'u32[144,128]{1,0:T(1,128)}', space=vmem, size = 0x12000, scoped, tag = 'internal scratch']
  #allocation2 [shape = 'f32[8,128]{1,0:T(8,128)}', space=vmem, size = 0x1000, scoped, tag = 'scratch operand']
  %s0 = inlined_call_operand.vmem [shape: bf16[8,256], index: 0, kind: input, shape index: {}]
  %s1 = inlined_call_operand.vmem [shape: bf16[256,128], index: 1, kind: input, shape index: {}]
  %s2 = inlined_call_operand.vmem [shape: f32[1,128], index: 2, kind: input, shape index: {}]
  %s3 = inlined_call_operand.vmem [shape: bf16[8,128], index: 3, kind: output, shape index: {}]
  %s4 = sld [smem:[#allocation0]]
  $region30: #{salclass_forward.15} parent=0
    _
  %s6 = ssub.s32 1, %s4
  %s7 = scalar_select 0, %s6, %s4
  // Predicated region
  $region2: #{salclass_forward.15} parent=0 // pred_check
    _
  $region3: #{salclass_forward.15} parent=0 // pred_check_branch
    %9 = sbr.rel (0) target = $region5
  $region4: #{salclass_forward.15} parent=0 // pred_region
    _
  $region5: #{salclass_forward.15} parent=0 // pred_fallthru
    _
  // Predicated region
  $region6: #{salclass_forward.15} parent=0 // pred_check
    _
  $region7: #{salclass_forward.15} parent=0 // pred_check_branch
    %11 = sbr.rel (0) target = $region9
  $region8: #{salclass_forward.15} parent=0 // pred_region
    _
  $region9: #{salclass_forward.15} parent=0 // pred_fallthru
    _
  // Predicated region
  $region10: #{salclass_forward.15} parent=0 // pred_check
    _
  $region11: #{salclass_forward.15} parent=0 // pred_check_branch
    %13 = sbr.rel (0) target = $region13
  $region12: #{salclass_forward.15} parent=0 // pred_region
    _
  $region13: #{salclass_forward.15} parent=0 // pred_fallthru
    _
  %p15 = scmp.eq.s32.totalorder 0, 0
  // Predicated region
  $region14: #{salclass_forward.15} parent=0 // pred_check
    %p16 = pneg %p15
  $region15: #{salclass_forward.15} parent=0 // pred_check_branch
    %18 = sbr.rel (%p16) target = $region17
  $region16: #{salclass_forward.15} parent=0 // pred_region
    %19 = vst [vmem:[#allocation2] sm:$0xff] 0.0
  $region17: #{salclass_forward.15} parent=0 // pred_fallthru
    _
  %v20 = vld [vmem:[%s0] sm:$0xff]
  %v21 = vld [vmem:[#allocation2] sm:$0xff]
  %v22 = vld [vmem:[%s1] sm:$0xf]
  %v23 = vld [vmem:[%s1 + $0x4] sm:$0xf]
  %v24 = vld [vmem:[%s1 + $0x8] sm:$0xf]
  %v25 = vld [vmem:[%s1 + $0xc] sm:$0xf]
  %v26 = vld [vmem:[%s1 + $0x10] sm:$0xf]
  %v27 = vld [vmem:[%s1 + $0x14] sm:$0xf]
  %v28 = vld [vmem:[%s1 + $0x18] sm:$0xf]
  %v29 = vld [vmem:[%s1 + $0x1c] sm:$0xf]
  %v30 = vld [vmem:[%s1 + $0x20] sm:$0xf]
  %v31 = vld [vmem:[%s1 + $0x24] sm:$0xf]
  %v32 = vld [vmem:[%s1 + $0x28] sm:$0xf]
  %v33 = vld [vmem:[%s1 + $0x2c] sm:$0xf]
  %v34 = vld [vmem:[%s1 + $0x30] sm:$0xf]
  %v35 = vld [vmem:[%s1 + $0x34] sm:$0xf]
  %v36 = vld [vmem:[%s1 + $0x38] sm:$0xf]
  %v37 = vld [vmem:[%s1 + $0x3c] sm:$0xf]
  %v38 = vld [vmem:[%s1 + $0x40] sm:$0xf]
  %v39 = vld [vmem:[%s1 + $0x44] sm:$0xf]
  %v40 = vld [vmem:[%s1 + $0x48] sm:$0xf]
  %v41 = vld [vmem:[%s1 + $0x4c] sm:$0xf]
  %v42 = vld [vmem:[%s1 + $0x50] sm:$0xf]
  %v43 = vld [vmem:[%s1 + $0x54] sm:$0xf]
  %v44 = vld [vmem:[%s1 + $0x58] sm:$0xf]
  %v45 = vld [vmem:[%s1 + $0x5c] sm:$0xf]
  %v46 = vld [vmem:[%s1 + $0x60] sm:$0xf]
  %v47 = vld [vmem:[%s1 + $0x64] sm:$0xf]
  %v48 = vld [vmem:[%s1 + $0x68] sm:$0xf]
  %v49 = vld [vmem:[%s1 + $0x6c] sm:$0xf]
  %v50 = vld [vmem:[%s1 + $0x70] sm:$0xf]
  %v51 = vld [vmem:[%s1 + $0x74] sm:$0xf]
  %v52 = vld [vmem:[%s1 + $0x78] sm:$0xf]
  %v53 = vld [vmem:[%s1 + $0x7c] sm:$0xf]
  %v55 = vunpack.c.l.b16 %v20
  %v56 = vunpack.c.h.b16 %v20
  %v57 = vpack.c.b16 %v55, %v55
  %v58 = vpack.c.b16 %v56, %v56
  %v93 = vunpack.c.l.b16 %v22
  %v94 = vunpack.c.l.b16 %v23
  %v95 = vunpack.c.l.b16 %v24
  %v96 = vunpack.c.l.b16 %v25
  %v97 = vunpack.c.l.b16 %v26
  %v98 = vunpack.c.l.b16 %v27
  %v99 = vunpack.c.l.b16 %v28
  %v100 = vunpack.c.l.b16 %v29
  %v101 = vunpack.c.l.b16 %v30
  %v102 = vunpack.c.l.b16 %v31
  %v103 = vunpack.c.l.b16 %v32
  %v104 = vunpack.c.l.b16 %v33
  %v105 = vunpack.c.l.b16 %v34
  %v106 = vunpack.c.l.b16 %v35
  %v107 = vunpack.c.l.b16 %v36
  %v108 = vunpack.c.l.b16 %v37
  %v109 = vunpack.c.l.b16 %v38
  %v110 = vunpack.c.l.b16 %v39
  %v111 = vunpack.c.l.b16 %v40
  %v112 = vunpack.c.l.b16 %v41
  %v113 = vunpack.c.l.b16 %v42
  %v114 = vunpack.c.l.b16 %v43
  %v115 = vunpack.c.l.b16 %v44
  %v116 = vunpack.c.l.b16 %v45
  %v117 = vunpack.c.l.b16 %v46
  %v118 = vunpack.c.l.b16 %v47
  %v119 = vunpack.c.l.b16 %v48
  %v120 = vunpack.c.l.b16 %v49
  %v121 = vunpack.c.l.b16 %v50
  %v122 = vunpack.c.l.b16 %v51
  %v123 = vunpack.c.l.b16 %v52
  %v124 = vunpack.c.l.b16 %v53
  %v125 = vpack.c.b16 %v94, %v93
  %v126 = vpack.c.b16 %v96, %v95
  %v127 = vpack.c.b16 %v98, %v97
  %v128 = vpack.c.b16 %v100, %v99
  %v129 = vpack.c.b16 %v102, %v101
  %v130 = vpack.c.b16 %v104, %v103
  %v131 = vpack.c.b16 %v106, %v105
  %v132 = vpack.c.b16 %v108, %v107
  %v133 = vpack.c.b16 %v110, %v109
  %v134 = vpack.c.b16 %v112, %v111
  %v135 = vpack.c.b16 %v114, %v113
  %v136 = vpack.c.b16 %v116, %v115
  %v137 = vpack.c.b16 %v118, %v117
  %v138 = vpack.c.b16 %v120, %v119
  %v139 = vpack.c.b16 %v122, %v121
  %v140 = vpack.c.b16 %v124, %v123
  %157 = vmatprep.subr.bf16.mxu0 0
  %158 = vmatpush1.bf16.msra.mxu0 %v125
  %159 = vmatprep.subr.bf16.mxu0 0
  %160 = vmatpush1.bf16.msra.mxu0 %v126
  %161 = vmatprep.subr.bf16.mxu0 0
  %162 = vmatpush1.bf16.msra.mxu0 %v127
  %163 = vmatprep.subr.bf16.mxu0 0
  %164 = vmatpush1.bf16.msra.mxu0 %v128
  %165 = vmatprep.subr.bf16.mxu0 0
  %166 = vmatpush1.bf16.msra.mxu0 %v129
  %167 = vmatprep.subr.bf16.mxu0 0
  %168 = vmatpush1.bf16.msra.mxu0 %v130
  %169 = vmatprep.subr.bf16.mxu0 0
  %170 = vmatpush1.bf16.msra.mxu0 %v131
  %171 = vmatprep.subr.bf16.mxu0 0
  %172 = vmatpush1.bf16.msra.mxu0 %v132
  %173 = vmatprep.subr.bf16.mxu0 0
  %174 = vmatpush1.bf16.msra.mxu0 %v133
  %175 = vmatprep.subr.bf16.mxu0 0
  %176 = vmatpush1.bf16.msra.mxu0 %v134
  %177 = vmatprep.subr.bf16.mxu0 0
  %178 = vmatpush1.bf16.msra.mxu0 %v135
  %179 = vmatprep.subr.bf16.mxu0 0
  %180 = vmatpush1.bf16.msra.mxu0 %v136
  %181 = vmatprep.subr.bf16.mxu0 0
  %182 = vmatpush1.bf16.msra.mxu0 %v137
  %183 = vmatprep.subr.bf16.mxu0 0
  %184 = vmatpush1.bf16.msra.mxu0 %v138
  %185 = vmatprep.subr.bf16.mxu0 0
  %186 = vmatpush1.bf16.msra.mxu0 %v139
  %187 = vmatprep.subr.bf16.mxu0 0
  %188 = vmatpush1.bf16.msra.mxu0 %v140
  %189 = vmatprep.mubr.bf16.mxu0 %v58
  %190 = vmatmul.mubr.bf16.gmra.mrb[0].mxu0 %v57
  %v191 = vpop.f32.mrb[0].mxu0
  %v192 = vadd.f32 0.0, %v191
  %v193 = vpop.f32.mrb[0].mxu0
  %v194 = vpop.f32.mrb[0].mxu0
  %v195 = vpop.f32.mrb[0].mxu0
  %196 = vdwg.mxu0
  %v197 = vadd.f32 %v21, %v192
  %198 = vst [vmem:[#allocation2] sm:$0xff] %v197
  // Predicated region
  $region18: #{salclass_forward.15} parent=0 // pred_check
    %p199 = pneg %p15
  $region19: #{salclass_forward.15} parent=0 // pred_check_branch
    %201 = sbr.rel (%p199) target = $region21
  $region20: #{salclass_forward.15} parent=0 // pred_region
    %v202 = vld [vmem:[#allocation2] sm:$0xff]
    %v203 = vld [vmem:[%s2] sm:$0x1]
    %v205 = vlaneseq
    %v206 = vshrl.u32 %v205, 7
    %v207 = vsub.s32 0, %v206
    %v208 = vrot.slane %v203, %v207
    %v210 = vadd.f32 %v202, %v208
    %v211 = vpack.c.bf16 %v210, %v210
    %212 = vst [vmem:[%s3] sm:$0xf] %v211
  $region21: #{salclass_forward.15} parent=0 // pred_fallthru
    _
  // Predicated region
  $region22: #{salclass_forward.15} parent=0 // pred_check
    _
  $region23: #{salclass_forward.15} parent=0 // pred_check_branch
    %214 = sbr.rel (0) target = $region25
  $region24: #{salclass_forward.15} parent=0 // pred_region
    _
  $region25: #{salclass_forward.15} parent=0 // pred_fallthru
    _
  // Predicated region
  $region26: #{salclass_forward.15} parent=0 // pred_check
    _
  $region27: #{salclass_forward.15} parent=0 // pred_check_branch
    %216 = sbr.rel (0) target = $region29
  $region28: #{salclass_forward.15} parent=0 // pred_region
    _
  $region29: #{salclass_forward.15} parent=0 // pred_fallthru
    _

// kernel: salclass_forward.19
$region0: #{salclass_forward.19}
  #allocation0 [shape = 'u32[]', space=smem, size = 0x4, offset = 0x4, fixed_abs, tag = 'smem constant byte address 0x4 - core index']
  #allocation1 [shape = 'u32[144,128]{1,0:T(1,128)}', space=vmem, size = 0x12000, scoped, tag = 'internal scratch']
  %s0 = inlined_call_operand.vmem [shape: bf16[2,5,32], index: 0, kind: input, shape index: {}]
  %s1 = inlined_call_operand.vmem [shape: bf16[2,4,64], index: 1, kind: input, shape index: {}]
  %s2 = inlined_call_operand.vmem [shape: bf16[2,5,32], index: 2, kind: output, shape index: {}]
  %s3 = sld [smem:[#allocation0]]
  $region41: #{salclass_forward.19} parent=0
    _
  %s5 = ssub.s32 1, %s3
  %s6 = scalar_select 0, %s5, %s3
  loop: start=0, step=1, limit=4
  $region2: #{salclass_forward.19} parent=0 // loop_pre_header
    _
  $region3: #{salclass_forward.19} parent=0 // loop_header
    %s8 = sphi 0, %s12
    %p9 = scmp.ge.s32.totalorder %s8, 4
    %s18 = sphi 0, %s20
    %s21 = sphi 0, %s18
    %s22 = sphi 0, %s21
    %s38 = sphi 0, %s22
    %s44 = sphi 0, %s46
    %s47 = sphi 0, %s44
    %s48 = sphi 0, %s47
    %s64 = sphi 0, %s48
    %s70 = sphi 0, %s72
    %s73 = sphi 0, %s70
    %s74 = sphi 0, %s73
    %s90 = sphi 0, %s74
  $region4: #{salclass_forward.19} parent=0 // loop_header_branch
    %11 = sbr.rel (%p9) target = $region8
  $region5: #{salclass_forward.19} parent=0 // loop_body
    %s13 = ssub.s32 %s8, 1
    %s14 = ssub.s32 %s8, 2
    %s15 = sadd.s32 %s8, 1
    %s16 = ssub.s32 %s8, %s15
    %p17 = scmp.eq.s32.totalorder %s16, 0
    %s19 = sadd.s32 %s18, 1
    %s20 = scalar_select %p17, %s18, %s19
    %p23 = pneg %p17
    %p24 = scmp.eq.s32.totalorder %s8, 1
    %p25 = por %p23, %p24
    %p26 = scmp.ne.s32.totalorder %s18, %s21
    %p27 = scmp.eq.s32.totalorder %s8, 0
    %p28 = por %p26, %p27
    %p29 = scmp.ne.s32.totalorder %s18, %s21
    %p30 = scmp.eq.s32.totalorder %s13, 1
    %p31 = por %p29, %p30
    %p32 = scmp.ne.s32.totalorder %s21, %s22
    %p33 = scmp.eq.s32.totalorder %s13, 0
    %p34 = por %p32, %p33
    %p35 = scmp.ne.s32.totalorder %s21, %s22
    %p36 = scmp.eq.s32.totalorder %s14, 1
    %p37 = por %p35, %p36
    %p39 = scmp.ne.s32.totalorder %s22, %s38
    %p40 = scmp.eq.s32.totalorder %s14, 0
    %p41 = por %p39, %p40
    %s42 = ssub.s32 %s8, %s15
    %p43 = scmp.eq.s32.totalorder %s42, 0
    %s45 = sadd.s32 %s44, 1
    %s46 = scalar_select %p43, %s44, %s45
    %p49 = pneg %p43
    %p50 = scmp.eq.s32.totalorder %s8, 1
    %p51 = por %p49, %p50
    %p52 = scmp.ne.s32.totalorder %s44, %s47
    %p53 = scmp.eq.s32.totalorder %s8, 0
    %p54 = por %p52, %p53
    %p55 = scmp.ne.s32.totalorder %s44, %s47
    %p56 = scmp.eq.s32.totalorder %s13, 1
    %p57 = por %p55, %p56
    %p58 = scmp.ne.s32.totalorder %s47, %s48
    %p59 = scmp.eq.s32.totalorder %s13, 0
    %p60 = por %p58, %p59
    %p61 = scmp.ne.s32.totalorder %s47, %s48
    %p62 = scmp.eq.s32.totalorder %s14, 1
    %p63 = por %p61, %p62
    %p65 = scmp.ne.s32.totalorder %s48, %s64
    %p66 = scmp.eq.s32.totalorder %s14, 0
    %p67 = por %p65, %p66
    %s68 = ssub.s32 %s8, %s15
    %p69 = scmp.eq.s32.totalorder %s68, 0
    %s71 = sadd.s32 %s70, 1
    %s72 = scalar_select %p69, %s70, %s71
    %p75 = pneg %p69
    %p76 = scmp.eq.s32.totalorder %s8, 1
    %p77 = por %p75, %p76
    %p78 = scmp.ne.s32.totalorder %s70, %s73
    %p79 = scmp.eq.s32.totalorder %s8, 0
    %p80 = por %p78, %p79
    %p81 = scmp.ne.s32.totalorder %s70, %s73
    %p82 = scmp.eq.s32.totalorder %s13, 1
    %p83 = por %p81, %p82
    %p84 = scmp.ne.s32.totalorder %s73, %s74
    %p85 = scmp.eq.s32.totalorder %s13, 0
    %p86 = por %p84, %p85
    %p87 = scmp.ne.s32.totalorder %s73, %s74
    %p88 = scmp.eq.s32.totalorder %s14, 1
    %p89 = por %p87, %p88
    %p91 = scmp.ne.s32.totalorder %s74, %s90
    %p92 = scmp.eq.s32.totalorder %s14, 0
    %p93 = por %p91, %p92
    %p94 = scmp.le.s32.totalorder 1, %s8
    %p95 = scmp.lt.s32.totalorder %s8, 3
    %p96 = pnand %p94, %p95
    %p97 = pneg %p96
    // Predicated region
    $region9: #{salclass_forward.19} parent=5 // pred_check
      _
    $region10: #{salclass_forward.19} parent=5 // pred_check_branch
      %99 = sbr.rel (%p96) target = $region12
    $region11: #{salclass_forward.19} parent=5 // pred_region
      %s100 = ssub.s32 %s8, 1
    $region12: #{salclass_forward.19} parent=5 // pred_fallthru
      _
    %p101 = scmp.lt.s32.totalorder %s8, 2
    // Predicated region
    $region13: #{salclass_forward.19} parent=5 // pred_check
      %p102 = pneg %p101
    $region14: #{salclass_forward.19} parent=5 // pred_check_branch
      %104 = sbr.rel (%p102) target = $region16
    $region15: #{salclass_forward.19} parent=5 // pred_region
      // Predicated region
      $region17: #{salclass_forward.19} parent=15 // pred_check
        %p105 = pneg %p28
      $region18: #{salclass_forward.19} parent=15 // pred_check_branch
        %107 = sbr.rel (%p105) target = $region20
      $region19: #{salclass_forward.19} parent=15 // pred_region
        %p108 = scmp.lt.s32.totalorder %s8, 1
        %s109 = scalar_select %p108, %s8, 1
        %s110 = smul.addr %s109, 4
        %s111 = scalar_lea.vmem %s0, %s110
      $region20: #{salclass_forward.19} parent=15 // pred_fallthru
        _
      // Predicated region
      $region21: #{salclass_forward.19} parent=15 // pred_check
        %p112 = pneg %p54
      $region22: #{salclass_forward.19} parent=15 // pred_check_branch
        %114 = sbr.rel (%p112) target = $region24
      $region23: #{salclass_forward.19} parent=15 // pred_region
        %p115 = scmp.lt.s32.totalorder %s8, 1
        %s116 = scalar_select %p115, %s8, 1
        %s117 = smul.addr %s116, 2
        %s118 = scalar_lea.vmem %s1, %s117
      $region24: #{salclass_forward.19} parent=15 // pred_fallthru
        _
    $region16: #{salclass_forward.19} parent=5 // pred_fallthru
      _
    %p119 = scmp.le.s32.totalorder 1, %s8
    %p120 = scmp.lt.s32.totalorder %s8, 3
    %p121 = pnand %p119, %p120
    %p122 = pneg %p121
    // Predicated region
    $region25: #{salclass_forward.19} parent=5 // pred_check
      _
    $region26: #{salclass_forward.19} parent=5 // pred_check_branch
      %124 = sbr.rel (%p121) target = $region28
    $region27: #{salclass_forward.19} parent=5 // pred_region
      %s125 = ssub.s32 %s8, 1
      %p126 = scmp.lt.s32.totalorder %s13, 1
      %s127 = scalar_select %p126, %s13, 1
      %s128 = smul.addr %s127, 4
      %s129 = scalar_lea.vmem %s0, %s128
      %p130 = pneg %p34
      %p131 = pneg %p31
      %p132 = scmp.lt.s32.totalorder %s13, 1
      %s133 = scalar_select %p132, %s13, 1
      %s134 = smul.addr %s133, 2
      %s135 = scalar_lea.vmem %s1, %s134
      %p136 = pneg %p60
      %p137 = pneg %p57
      %p138 = pneg %p86
      %p139 = pneg %p83
      %p140 = scmp.lt.s32.totalorder %s13, 1
      %s141 = scalar_select %p140, %s13, 1
      %s142 = smul.addr %s141, 4
      %s143 = scalar_lea.vmem %s2, %s142
      %p144 = scmp.lt.s32.totalorder %s13, 1
      %s145 = scalar_select %p144, %s13, 1
      %s146 = smul.addr %s145, 4
      %s147 = scalar_lea.vmem %s0, %s146
      %p148 = scmp.lt.s32.totalorder %s13, 1
      %s149 = scalar_select %p148, %s13, 1
      %s150 = smul.addr %s149, 2
      %s151 = scalar_lea.vmem %s1, %s150
      %p152 = scmp.lt.s32.totalorder %s13, 1
      %s153 = scalar_select %p152, %s13, 1
      %s154 = smul.addr %s153, 4
      %s155 = scalar_lea.vmem %s2, %s154
      %v157 = vld [vmem:[%s147] sm:$0x7]
      %v158 = vld [vmem:[%s151] sm:$0x3]
      %vm159 = vcmask 130048
      %v161 = vsel %vm159, %v157, 0
      %v164 = vsel %vm159, %v158, 0
      %166 = vmatprep.subr.bf16.mxu0 0
      %167 = vmatpush1.bf16.xpose.msra.mxu0 %v164
      %168 = vmatprep.subr.bf16.mxu0 0
      %169 = vmatpush1.bf16.xpose.msra.mxu0 0
      %170 = vmatprep.subr.bf16.mxu0 0
      %171 = vmatpush1.bf16.xpose.msra.mxu0 0
      %172 = vmatprep.subr.bf16.mxu0 0
      %173 = vmatpush1.bf16.xpose.msra.mxu0 0
      %174 = vmatprep.subr.bf16.mxu0 0
      %175 = vmatpush1.bf16.xpose.msra.mxu0 0
      %176 = vmatprep.subr.bf16.mxu0 0
      %177 = vmatpush1.bf16.xpose.msra.mxu0 0
      %178 = vmatprep.subr.bf16.mxu0 0
      %179 = vmatpush1.bf16.xpose.msra.mxu0 0
      %180 = vmatprep.subr.bf16.mxu0 0
      %181 = vmatpush1.bf16.xpose.msra.mxu0 0
      %182 = vmatprep.subr.bf16.mxu0 0
      %183 = vmatpush1.bf16.xpose.msra.mxu0 0
      %184 = vmatprep.subr.bf16.mxu0 0
      %185 = vmatpush1.bf16.xpose.msra.mxu0 0
      %186 = vmatprep.subr.bf16.mxu0 0
      %187 = vmatpush1.bf16.xpose.msra.mxu0 0
      %188 = vmatprep.subr.bf16.mxu0 0
      %189 = vmatpush1.bf16.xpose.msra.mxu0 0
      %190 = vmatprep.subr.bf16.mxu0 0
      %191 = vmatpush1.bf16.xpose.msra.mxu0 0
      %192 = vmatprep.subr.bf16.mxu0 0
      %193 = vmatpush1.bf16.xpose.msra.mxu0 0
      %194 = vmatprep.subr.bf16.mxu0 0
      %195 = vmatpush1.bf16.xpose.msra.mxu0 0
      %196 = vmatprep.subr.bf16.mxu0 0
      %197 = vmatpush1.bf16.xpose.msra.mxu0 0
      %198 = vmatprep.mubr.bf16.mxu0 0
      %199 = vmatmul.mubr.bf16.gmra.mrb[0].mxu0 %v161
      %v200 = vpop.f32.mrb[0].mxu0
      %v201 = vadd.f32 0.0, %v200
      %v202 = vpop.f32.mrb[0].mxu0
      %v203 = vpop.f32.mrb[0].mxu0
      %v204 = vpop.f32.mrb[0].mxu0
      %205 = vdwg.mxu0
      %v206 = vmul.f32 %v201, 0.25
      %vm207 = vcmask 28672
      %v208 = vsel %vm207, %v206, -inf
      %209 = vmax.xlane.f32.xlu0 %v208
      %v210 = vpop.xlane.xlu0 %209
      %v211 = vsub.f32 %v206, %v210
      %v212 = vmul.f32 %v211, 1.442695
      %v213 = vpow.pop %v212
      %v214 = vsel %vm207, %v213, 0.0
      %215 = vadd.xlane.f32.xlu0 %v214
      %v216 = vpop.xlane.xlu0 %215
      %v217 = vrcp.pop %v216
      %v218 = vmul.f32 %v213, %v217
      %v219 = vpack.c.bf16 %v218, %v218
      %v222 = vunpack.c.l.s4 1983009808
      %v223 = vunpack.c.0.s8 %v222
      %v224 = vlaneseq
      %v225 = vshrl.u32 %v224, 7
      %v226 = vsub.s32 %v223, %v225
      %v227 = vrot.slane %v158, %v226
      %228 = vrot.lane.b32.xlu0 %v227, 96
      %v229 = vpop.permute.xlu0 %228
      %vm230 = vcmask 31744
      %v232 = vsel %vm230, %v219, 0
      %vm234 = vcmask 1041408
      %v236 = vsel %vm234, %v229, 0
      %238 = vmatprep.subr.bf16.mxu0 0
      %239 = vmatpush1.bf16.msra.mxu0 %v236
      %240 = vmatprep.subr.bf16.mxu0 0
      %241 = vmatpush1.bf16.msra.mxu0 0
      %242 = vmatprep.subr.bf16.mxu0 0
      %243 = vmatpush1.bf16.msra.mxu0 0
      %244 = vmatprep.subr.bf16.mxu0 0
      %245 = vmatpush1.bf16.msra.mxu0 0
      %246 = vmatprep.subr.bf16.mxu0 0
      %247 = vmatpush1.bf16.msra.mxu0 0
      %248 = vmatprep.subr.bf16.mxu0 0
      %249 = vmatpush1.bf16.msra.mxu0 0
      %250 = vmatprep.subr.bf16.mxu0 0
      %251 = vmatpush1.bf16.msra.mxu0 0
      %252 = vmatprep.subr.bf16.mxu0 0
      %253 = vmatpush1.bf16.msra.mxu0 0
      %254 = vmatprep.subr.bf16.mxu0 0
      %255 = vmatpush1.bf16.msra.mxu0 0
      %256 = vmatprep.subr.bf16.mxu0 0
      %257 = vmatpush1.bf16.msra.mxu0 0
      %258 = vmatprep.subr.bf16.mxu0 0
      %259 = vmatpush1.bf16.msra.mxu0 0
      %260 = vmatprep.subr.bf16.mxu0 0
      %261 = vmatpush1.bf16.msra.mxu0 0
      %262 = vmatprep.subr.bf16.mxu0 0
      %263 = vmatpush1.bf16.msra.mxu0 0
      %264 = vmatprep.subr.bf16.mxu0 0
      %265 = vmatpush1.bf16.msra.mxu0 0
      %266 = vmatprep.subr.bf16.mxu0 0
      %267 = vmatpush1.bf16.msra.mxu0 0
      %268 = vmatprep.subr.bf16.mxu0 0
      %269 = vmatpush1.bf16.msra.mxu0 0
      %270 = vmatprep.mubr.bf16.mxu0 0
      %271 = vmatmul.mubr.bf16.gmra.mrb[0].mxu0 %v232
      %v272 = vpop.f32.mrb[0].mxu0
      %v273 = vadd.f32 0.0, %v272
      %v274 = vpop.f32.mrb[0].mxu0
      %v275 = vpop.f32.mrb[0].mxu0
      %v276 = vpop.f32.mrb[0].mxu0
      %277 = vdwg.mxu0
      %v279 = vunpack.c.l.b16 %v157
      %v280 = vpack.c.b16 %v279, %v279
      %281 = vrot.lane.b32.xlu0 %v280, 112
      %v282 = vpop.permute.xlu0 %281
      %283 = vrot.lane.b32.xlu0 %v227, 112
      %v284 = vpop.permute.xlu0 %283
      %v286 = vsel %vm159, %v282, 0
      %v289 = vsel %vm159, %v284, 0
      %291 = vmatprep.subr.bf16.mxu0 0
      %292 = vmatpush1.bf16.xpose.msra.mxu0 %v289
      %293 = vmatprep.subr.bf16.mxu0 0
      %294 = vmatpush1.bf16.xpose.msra.mxu0 0
      %295 = vmatprep.subr.bf16.mxu0 0
      %296 = vmatpush1.bf16.xpose.msra.mxu0 0
      %297 = vmatprep.subr.bf16.mxu0 0
      %298 = vmatpush1.bf16.xpose.msra.mxu0 0
      %299 = vmatprep.subr.bf16.mxu0 0
      %300 = vmatpush1.bf16.xpose.msra.mxu0 0
      %301 = vmatprep.subr.bf16.mxu0 0
      %302 = vmatpush1.bf16.xpose.msra.mxu0 0
      %303 = vmatprep.subr.bf16.mxu0 0
      %304 = vmatpush1.bf16.xpose.msra.mxu0 0
      %305 = vmatprep.subr.bf16.mxu0 0
      %306 = vmatpush1.bf16.xpose.msra.mxu0 0
      %307 = vmatprep.subr.bf16.mxu0 0
      %308 = vmatpush1.bf16.xpose.msra.mxu0 0
      %309 = vmatprep.subr.bf16.mxu0 0
      %310 = vmatpush1.bf16.xpose.msra.mxu0 0
      %311 = vmatprep.subr.bf16.mxu0 0
      %312 = vmatpush1.bf16.xpose.msra.mxu0 0
      %313 = vmatprep.subr.bf16.mxu0 0
      %314 = vmatpush1.bf16.xpose.msra.mxu0 0
      %315 = vmatprep.subr.bf16.mxu0 0
      %316 = vmatpush1.bf16.xpose.msra.mxu0 0
      %317 = vmatprep.subr.bf16.mxu0 0
      %318 = vmatpush1.bf16.xpose.msra.mxu0 0
      %319 = vmatprep.subr.bf16.mxu0 0
      %320 = vmatpush1.bf16.xpose.msra.mxu0 0
      %321 = vmatprep.subr.bf16.mxu0 0
      %322 = vmatpush1.bf16.xpose.msra.mxu0 0
      %323 = vmatprep.mubr.bf16.mxu0 0
      %324 = vmatmul.mubr.bf16.gmra.mrb[0].mxu0 %v286
      %v325 = vpop.f32.mrb[0].mxu0
      %v326 = vadd.f32 0.0, %v325
      %v327 = vpop.f32.mrb[0].mxu0
      %v328 = vpop.f32.mrb[0].mxu0
      %v329 = vpop.f32.mrb[0].mxu0
      %330 = vdwg.mxu0
      %v331 = vmul.f32 %v326, 0.25
      %v332 = vsel %vm207, %v331, -inf
      %333 = vmax.xlane.f32.xlu0 %v332
      %v334 = vpop.xlane.xlu0 %333
      %v335 = vsub.f32 %v331, %v334
      %v336 = vmul.f32 %v335, 1.442695
      %v337 = vpow.pop %v336
      %v338 = vsel %vm207, %v337, 0.0
      %339 = vadd.xlane.f32.xlu0 %v338
      %v340 = vpop.xlane.xlu0 %339
      %v341 = vrcp.pop %v340
      %v342 = vmul.f32 %v337, %v341
      %v343 = vpack.c.bf16 %v342, %v342
      %344 = vrot.lane.b32.xlu0 %v227, 80
      %v345 = vpop.permute.xlu0 %344
      %v347 = vsel %vm230, %v343, 0
      %v350 = vsel %vm234, %v345, 0
      %352 = vmatprep.subr.bf16.mxu0 0
      %353 = vmatpush1.bf16.msra.mxu0 %v350
      %354 = vmatprep.subr.bf16.mxu0 0
      %355 = vmatpush1.bf16.msra.mxu0 0
      %356 = vmatprep.subr.bf16.mxu0 0
      %357 = vmatpush1.bf16.msra.mxu0 0
      %358 = vmatprep.subr.bf16.mxu0 0
      %359 = vmatpush1.bf16.msra.mxu0 0
      %360 = vmatprep.subr.bf16.mxu0 0
      %361 = vmatpush1.bf16.msra.mxu0 0
      %362 = vmatprep.subr.bf16.mxu0 0
      %363 = vmatpush1.bf16.msra.mxu0 0
      %364 = vmatprep.subr.bf16.mxu0 0
      %365 = vmatpush1.bf16.msra.mxu0 0
      %366 = vmatprep.subr.bf16.mxu0 0
      %367 = vmatpush1.bf16.msra.mxu0 0
      %368 = vmatprep.subr.bf16.mxu0 0
      %369 = vmatpush1.bf16.msra.mxu0 0
      %370 = vmatprep.subr.bf16.mxu0 0
      %371 = vmatpush1.bf16.msra.mxu0 0
      %372 = vmatprep.subr.bf16.mxu0 0
      %373 = vmatpush1.bf16.msra.mxu0 0
      %374 = vmatprep.subr.bf16.mxu0 0
      %375 = vmatpush1.bf16.msra.mxu0 0
      %376 = vmatprep.subr.bf16.mxu0 0
      %377 = vmatpush1.bf16.msra.mxu0 0
      %378 = vmatprep.subr.bf16.mxu0 0
      %379 = vmatpush1.bf16.msra.mxu0 0
      %380 = vmatprep.subr.bf16.mxu0 0
      %381 = vmatpush1.bf16.msra.mxu0 0
      %382 = vmatprep.subr.bf16.mxu0 0
      %383 = vmatpush1.bf16.msra.mxu0 0
      %384 = vmatprep.mubr.bf16.mxu0 0
      %385 = vmatmul.mubr.bf16.gmra.mrb[0].mxu0 %v347
      %v386 = vpop.f32.mrb[0].mxu0
      %v387 = vadd.f32 0.0, %v386
      %v388 = vpop.f32.mrb[0].mxu0
      %v389 = vpop.f32.mrb[0].mxu0
      %v390 = vpop.f32.mrb[0].mxu0
      %391 = vdwg.mxu0
      %393 = vrot.lane.b32.xlu0 %v387, 16
      %v394 = vpop.permute.xlu0 %393
      %v396 = vsel %vm159, %v273, %v394
      %v397 = vpack.c.bf16 %v396, %v396
      %vm398 = vcmask 256000
      %vm399 = vsmask.f32 2304
      %vm400 = vmand %vm398, %vm399
      %v401 = vld [vmem:[%s155] sm:$0x7]
      %v402 = vsel %vm400, %v397, %v401
      %403 = vst [vmem:[%s155] sm:$0x7] %v402
      %p404 = scmp.lt.s32.totalorder %s13, 1
      %s405 = scalar_select %p404, %s13, 1
      %s406 = smul.addr %s405, 4
      %s407 = scalar_lea.vmem %s2, %s406
      // Predicated region
      $region29: #{salclass_forward.19} parent=27 // pred_check
        %p408 = pneg %p83
      $region30: #{salclass_forward.19} parent=27 // pred_check_branch
        %410 = sbr.rel (%p408) target = $region32
      $region31: #{salclass_forward.19} parent=27 // pred_region
        _
      $region32: #{salclass_forward.19} parent=27 // pred_fallthru
        _
    $region28: #{salclass_forward.19} parent=5 // pred_fallthru
      _
    %p411 = scmp.le.s32.totalorder 2, %s8
    // Predicated region
    $region33: #{salclass_forward.19} parent=5 // pred_check
      %p412 = pneg %p411
    $region34: #{salclass_forward.19} parent=5 // pred_check_branch
      %414 = sbr.rel (%p412) target = $region36
    $region35: #{salclass_forward.19} parent=5 // pred_region
      %s415 = ssub.s32 %s8, 2
      // Predicated region
      $region37: #{salclass_forward.19} parent=35 // pred_check
        %p416 = pneg %p89
      $region38: #{salclass_forward.19} parent=35 // pred_check_branch
        %418 = sbr.rel (%p416) target = $region40
      $region39: #{salclass_forward.19} parent=35 // pred_region
        %p419 = scmp.lt.s32.totalorder %s14, 1
        %s420 = scalar_select %p419, %s14, 1
        %s421 = smul.addr %s420, 4
        %s422 = scalar_lea.vmem %s2, %s421
      $region40: #{salclass_forward.19} parent=35 // pred_fallthru
        _
    $region36: #{salclass_forward.19} parent=5 // pred_fallthru
      _
  $region6: #{salclass_forward.19} parent=0 // loop_footer
    %s12 = sadd.s32 1, %s8
  $region7: #{salclass_forward.19} parent=0 // loop_footer_branch
    %7 = sbr.rel target = $region3
  $region8: #{salclass_forward.19} parent=0 // loop_exit
    _

// kernel: salclass_forward.18
$region0: #{salclass_forward.18}
  #allocation0 [shape = 'u32[]', space=smem, size = 0x4, offset = 0x4, fixed_abs, tag = 'smem constant byte address 0x4 - core index']
  #allocation1 [shape = 'u32[144,128]{1,0:T(1,128)}', space=vmem, size = 0x12000, scoped, tag = 'internal scratch']
  #allocation2 [shape = 'f32[8,128]{1,0:T(8,128)}', space=vmem, size = 0x1000, scoped, tag = 'scratch operand']
  %s0 = inlined_call_operand.vmem [shape: bf16[8,128], index: 0, kind: input, shape index: {}]
  %s1 = inlined_call_operand.vmem [shape: f32[1,128], index: 1, kind: input, shape index: {}]
  %s2 = inlined_call_operand.vmem [shape: f32[1,128], index: 2, kind: input, shape index: {}]
  %s3 = inlined_call_operand.vmem [shape: bf16[128,128], index: 3, kind: input, shape index: {}]
  %s4 = inlined_call_operand.vmem [shape: f32[1,128], index: 4, kind: input, shape index: {}]
  %s5 = inlined_call_operand.vmem [shape: bf16[8,128], index: 5, kind: output, shape index: {}]
  %s6 = sld [smem:[#allocation0]]
  $region38: #{salclass_forward.18} parent=0
    _
  %s8 = ssub.s32 1, %s6
  %s9 = scalar_select 0, %s8, %s6
  // Predicated region
  $region2: #{salclass_forward.18} parent=0 // pred_check
    _
  $region3: #{salclass_forward.18} parent=0 // pred_check_branch
    %11 = sbr.rel (0) target = $region5
  $region4: #{salclass_forward.18} parent=0 // pred_region
    _
  $region5: #{salclass_forward.18} parent=0 // pred_fallthru
    _
  // Predicated region
  $region6: #{salclass_forward.18} parent=0 // pred_check
    _
  $region7: #{salclass_forward.18} parent=0 // pred_check_branch
    %13 = sbr.rel (0) target = $region9
  $region8: #{salclass_forward.18} parent=0 // pred_region
    _
  $region9: #{salclass_forward.18} parent=0 // pred_fallthru
    _
  // Predicated region
  $region10: #{salclass_forward.18} parent=0 // pred_check
    _
  $region11: #{salclass_forward.18} parent=0 // pred_check_branch
    %15 = sbr.rel (0) target = $region13
  $region12: #{salclass_forward.18} parent=0 // pred_region
    _
  $region13: #{salclass_forward.18} parent=0 // pred_fallthru
    _
  // Predicated region
  $region14: #{salclass_forward.18} parent=0 // pred_check
    _
  $region15: #{salclass_forward.18} parent=0 // pred_check_branch
    %17 = sbr.rel (0) target = $region17
  $region16: #{salclass_forward.18} parent=0 // pred_region
    _
  $region17: #{salclass_forward.18} parent=0 // pred_fallthru
    _
  // Predicated region
  $region18: #{salclass_forward.18} parent=0 // pred_check
    _
  $region19: #{salclass_forward.18} parent=0 // pred_check_branch
    %19 = sbr.rel (0) target = $region21
  $region20: #{salclass_forward.18} parent=0 // pred_region
    _
  $region21: #{salclass_forward.18} parent=0 // pred_fallthru
    _
  %p21 = scmp.eq.s32.totalorder 0, 0
  // Predicated region
  $region22: #{salclass_forward.18} parent=0 // pred_check
    %p22 = pneg %p21
  $region23: #{salclass_forward.18} parent=0 // pred_check_branch
    %24 = sbr.rel (%p22) target = $region25
  $region24: #{salclass_forward.18} parent=0 // pred_region
    %25 = vst [vmem:[#allocation2] sm:$0xff] 0.0
  $region25: #{salclass_forward.18} parent=0 // pred_fallthru
    _
  %v26 = vld [vmem:[%s0] sm:$0xf]
  %v27 = vunpack.c.l.bf16 %v26
  %28 = vadd.xlane.f32.xlu0 %v27
  %v29 = vpop.xlane.xlu0 %28
  %v30 = vmul.f32 %v29, 0.03125
  %v31 = vmul.f32 %v27, %v27
  %32 = vadd.xlane.f32.xlu0 %v31
  %v33 = vpop.xlane.xlu0 %32
  %v34 = vmul.f32 %v33, 0.03125
  %v35 = vmul.f32 %v30, %v30
  %v36 = vsub.f32 %v34, %v35
  %v37 = vadd.f32 %v36, 1e-05
  %v38 = vrsqrt.pop %v37
  %v39 = vsub.f32 %v27, %v30
  %v40 = vmul.f32 %v39, %v38
  %v41 = vld [vmem:[%s1] sm:$0x1]
  %v43 = vlaneseq
  %v44 = vshrl.u32 %v43, 7
  %v45 = vsub.s32 0, %v44
  %v46 = vrot.slane %v41, %v45
  %v48 = vmul.f32 %v40, %v46
  %v49 = vld [vmem:[%s2] sm:$0x1]
  %v51 = vlaneseq
  %v52 = vshrl.u32 %v51, 7
  %v53 = vsub.s32 0, %v52
  %v54 = vrot.slane %v49, %v53
  %v56 = vadd.f32 %v48, %v54
  %v57 = vpack.c.bf16 %v56, %v56
  %v58 = vld [vmem:[#allocation2] sm:$0xff]
  %v59 = vld [vmem:[%s3] sm:$0xf]
  %v60 = vld [vmem:[%s3 + $0x4] sm:$0xf]
  %v61 = vld [vmem:[%s3 + $0x8] sm:$0xf]
  %v62 = vld [vmem:[%s3 + $0xc] sm:$0xf]
  %v63 = vld [vmem:[%s3 + $0x10] sm:$0xf]
  %v64 = vld [vmem:[%s3 + $0x14] sm:$0xf]
  %v65 = vld [vmem:[%s3 + $0x18] sm:$0xf]
  %v66 = vld [vmem:[%s3 + $0x1c] sm:$0xf]
  %v67 = vld [vmem:[%s3 + $0x20] sm:$0xf]
  %v68 = vld [vmem:[%s3 + $0x24] sm:$0xf]
  %v69 = vld [vmem:[%s3 + $0x28] sm:$0xf]
  %v70 = vld [vmem:[%s3 + $0x2c] sm:$0xf]
  %v71 = vld [vmem:[%s3 + $0x30] sm:$0xf]
  %v72 = vld [vmem:[%s3 + $0x34] sm:$0xf]
  %v73 = vld [vmem:[%s3 + $0x38] sm:$0xf]
  %v74 = vld [vmem:[%s3 + $0x3c] sm:$0xf]
  %v91 = vunpack.c.l.b16 %v59
  %v92 = vunpack.c.l.b16 %v60
  %v93 = vunpack.c.l.b16 %v61
  %v94 = vunpack.c.l.b16 %v62
  %v95 = vunpack.c.l.b16 %v63
  %v96 = vunpack.c.l.b16 %v64
  %v97 = vunpack.c.l.b16 %v65
  %v98 = vunpack.c.l.b16 %v66
  %v99 = vunpack.c.l.b16 %v67
  %v100 = vunpack.c.l.b16 %v68
  %v101 = vunpack.c.l.b16 %v69
  %v102 = vunpack.c.l.b16 %v70
  %v103 = vunpack.c.l.b16 %v71
  %v104 = vunpack.c.l.b16 %v72
  %v105 = vunpack.c.l.b16 %v73
  %v106 = vunpack.c.l.b16 %v74
  %v107 = vpack.c.b16 %v92, %v91
  %v108 = vpack.c.b16 %v94, %v93
  %v109 = vpack.c.b16 %v96, %v95
  %v110 = vpack.c.b16 %v98, %v97
  %v111 = vpack.c.b16 %v100, %v99
  %v112 = vpack.c.b16 %v102, %v101
  %v113 = vpack.c.b16 %v104, %v103
  %v114 = vpack.c.b16 %v106, %v105
  %123 = vmatprep.subr.bf16.mxu0 0
  %124 = vmatpush1.bf16.msra.mxu0 %v107
  %125 = vmatprep.subr.bf16.mxu0 0
  %126 = vmatpush1.bf16.msra.mxu0 %v108
  %127 = vmatprep.subr.bf16.mxu0 0
  %128 = vmatpush1.bf16.msra.mxu0 %v109
  %129 = vmatprep.subr.bf16.mxu0 0
  %130 = vmatpush1.bf16.msra.mxu0 %v110
  %131 = vmatprep.subr.bf16.mxu0 0
  %132 = vmatpush1.bf16.msra.mxu0 %v111
  %133 = vmatprep.subr.bf16.mxu0 0
  %134 = vmatpush1.bf16.msra.mxu0 %v112
  %135 = vmatprep.subr.bf16.mxu0 0
  %136 = vmatpush1.bf16.msra.mxu0 %v113
  %137 = vmatprep.subr.bf16.mxu0 0
  %138 = vmatpush1.bf16.msra.mxu0 %v114
  %139 = vmatprep.subr.bf16.mxu0 0
  %140 = vmatpush1.bf16.msra.mxu0 0
  %141 = vmatprep.subr.bf16.mxu0 0
  %142 = vmatpush1.bf16.msra.mxu0 0
  %143 = vmatprep.subr.bf16.mxu0 0
  %144 = vmatpush1.bf16.msra.mxu0 0
  %145 = vmatprep.subr.bf16.mxu0 0
  %146 = vmatpush1.bf16.msra.mxu0 0
  %147 = vmatprep.subr.bf16.mxu0 0
  %148 = vmatpush1.bf16.msra.mxu0 0
  %149 = vmatprep.subr.bf16.mxu0 0
  %150 = vmatpush1.bf16.msra.mxu0 0
  %151 = vmatprep.subr.bf16.mxu0 0
  %152 = vmatpush1.bf16.msra.mxu0 0
  %153 = vmatprep.subr.bf16.mxu0 0
  %154 = vmatpush1.bf16.msra.mxu0 0
  %155 = vmatprep.mubr.bf16.mxu0 0
  %156 = vmatmul.mubr.bf16.gmra.mrb[0].mxu0 %v57
  %v157 = vpop.f32.mrb[0].mxu0
  %v158 = vadd.f32 0.0, %v157
  %v159 = vpop.f32.mrb[0].mxu0
  %v160 = vpop.f32.mrb[0].mxu0
  %v161 = vpop.f32.mrb[0].mxu0
  %162 = vdwg.mxu0
  %v163 = vadd.f32 %v58, %v158
  %164 = vst [vmem:[#allocation2] sm:$0xff] %v163
  // Predicated region
  $region26: #{salclass_forward.18} parent=0 // pred_check
    %p165 = pneg %p21
  $region27: #{salclass_forward.18} parent=0 // pred_check_branch
    %167 = sbr.rel (%p165) target = $region29
  $region28: #{salclass_forward.18} parent=0 // pred_region
    %v168 = vld [vmem:[#allocation2] sm:$0xff]
    %v169 = vld [vmem:[%s4] sm:$0x1]
    %v171 = vlaneseq
    %v172 = vshrl.u32 %v171, 7
    %v173 = vsub.s32 0, %v172
    %v174 = vrot.slane %v169, %v173
    %v176 = vadd.f32 %v168, %v174
    %v177 = vpack.c.bf16 %v176, %v176
    %178 = vst [vmem:[%s5] sm:$0xf] %v177
  $region29: #{salclass_forward.18} parent=0 // pred_fallthru
    _
  // Predicated region
  $region30: #{salclass_forward.18} parent=0 // pred_check
    _
  $region31: #{salclass_forward.18} parent=0 // pred_check_branch
    %180 = sbr.rel (0) target = $region33
  $region32: #{salclass_forward.18} parent=0 // pred_region
    _
  $region33: #{salclass_forward.18} parent=0 // pred_fallthru
    _
  // Predicated region
  $region34: #{salclass_forward.18} parent=0 // pred_check
    _
  $region35: #{salclass_forward.18} parent=0 // pred_check_branch
    %182 = sbr.rel (0) target = $region37
  $region36: #{salclass_forward.18} parent=0 // pred_region
    _
  $region37: #{salclass_forward.18} parent=0 // pred_fallthru
    _

// kernel: salclass_forward.20
$region0: #{salclass_forward.20}
  #allocation0 [shape = 'u32[]', space=smem, size = 0x4, offset = 0x4, fixed_abs, tag = 'smem constant byte address 0x4 - core index']
  #allocation1 [shape = 'u32[144,128]{1,0:T(1,128)}', space=vmem, size = 0x12000, scoped, tag = 'internal scratch']
  #allocation2 [shape = 'f32[16,128]{1,0:T(8,128)}', space=vmem, size = 0x2000, scoped, tag = 'scratch operand']
  %s0 = inlined_call_operand.vmem [shape: bf16[16,128], index: 0, kind: input, shape index: {}]
  %s1 = inlined_call_operand.vmem [shape: bf16[128,128], index: 1, kind: input, shape index: {}]
  %s2 = inlined_call_operand.vmem [shape: f32[1,128], index: 2, kind: input, shape index: {}]
  %s3 = inlined_call_operand.vmem [shape: bf16[16,128], index: 3, kind: input, shape index: {}]
  %s4 = inlined_call_operand.vmem [shape: bf16[16,128], index: 4, kind: output, shape index: {}]
  %s5 = sld [smem:[#allocation0]]
  $region34: #{salclass_forward.20} parent=0
    _
  %s7 = ssub.s32 1, %s5
  %s8 = scalar_select 0, %s7, %s5
  // Predicated region
  $region2: #{salclass_forward.20} parent=0 // pred_check
    _
  $region3: #{salclass_forward.20} parent=0 // pred_check_branch
    %10 = sbr.rel (0) target = $region5
  $region4: #{salclass_forward.20} parent=0 // pred_region
    _
  $region5: #{salclass_forward.20} parent=0 // pred_fallthru
    _
  // Predicated region
  $region6: #{salclass_forward.20} parent=0 // pred_check
    _
  $region7: #{salclass_forward.20} parent=0 // pred_check_branch
    %12 = sbr.rel (0) target = $region9
  $region8: #{salclass_forward.20} parent=0 // pred_region
    _
  $region9: #{salclass_forward.20} parent=0 // pred_fallthru
    _
  // Predicated region
  $region10: #{salclass_forward.20} parent=0 // pred_check
    _
  $region11: #{salclass_forward.20} parent=0 // pred_check_branch
    %14 = sbr.rel (0) target = $region13
  $region12: #{salclass_forward.20} parent=0 // pred_region
    _
  $region13: #{salclass_forward.20} parent=0 // pred_fallthru
    _
  // Predicated region
  $region14: #{salclass_forward.20} parent=0 // pred_check
    _
  $region15: #{salclass_forward.20} parent=0 // pred_check_branch
    %16 = sbr.rel (0) target = $region17
  $region16: #{salclass_forward.20} parent=0 // pred_region
    _
  $region17: #{salclass_forward.20} parent=0 // pred_fallthru
    _
  %p18 = scmp.eq.s32.totalorder 0, 0
  // Predicated region
  $region18: #{salclass_forward.20} parent=0 // pred_check
    %p19 = pneg %p18
  $region19: #{salclass_forward.20} parent=0 // pred_check_branch
    %21 = sbr.rel (%p19) target = $region21
  $region20: #{salclass_forward.20} parent=0 // pred_region
    %22 = vst [vmem:[#allocation2] sm:$0xff] 0.0
    %23 = vst [vmem:[#allocation2 + $0x8] sm:$0xff] 0.0
  $region21: #{salclass_forward.20} parent=0 // pred_fallthru
    _
  %v24 = vld [vmem:[%s0] sm:$0xf]
  %v25 = vld [vmem:[%s0 + $0x4] sm:$0xf]
  %v26 = vld [vmem:[#allocation2] sm:$0xff]
  %v27 = vld [vmem:[#allocation2 + $0x8] sm:$0xff]
  %v28 = vld [vmem:[%s1] sm:$0xf]
  %v29 = vld [vmem:[%s1 + $0x4] sm:$0xf]
  %v30 = vld [vmem:[%s1 + $0x8] sm:$0xf]
  %v31 = vld [vmem:[%s1 + $0xc] sm:$0xf]
  %v32 = vld [vmem:[%s1 + $0x10] sm:$0xf]
  %v33 = vld [vmem:[%s1 + $0x14] sm:$0xf]
  %v34 = vld [vmem:[%s1 + $0x18] sm:$0xf]
  %v35 = vld [vmem:[%s1 + $0x1c] sm:$0xf]
  %v36 = vld [vmem:[%s1 + $0x20] sm:$0xf]
  %v37 = vld [vmem:[%s1 + $0x24] sm:$0xf]
  %v38 = vld [vmem:[%s1 + $0x28] sm:$0xf]
  %v39 = vld [vmem:[%s1 + $0x2c] sm:$0xf]
  %v40 = vld [vmem:[%s1 + $0x30] sm:$0xf]
  %v41 = vld [vmem:[%s1 + $0x34] sm:$0xf]
  %v42 = vld [vmem:[%s1 + $0x38] sm:$0xf]
  %v43 = vld [vmem:[%s1 + $0x3c] sm:$0xf]
  %v46 = vunpack.c.l.b16 %v24
  %v47 = vunpack.c.l.b16 %v25
  %v48 = vpack.c.b16 %v47, %v46
  %v66 = vunpack.c.l.b16 %v28
  %v67 = vunpack.c.l.b16 %v29
  %v68 = vunpack.c.l.b16 %v30
  %v69 = vunpack.c.l.b16 %v31
  %v70 = vunpack.c.l.b16 %v32
  %v71 = vunpack.c.l.b16 %v33
  %v72 = vunpack.c.l.b16 %v34
  %v73 = vunpack.c.l.b16 %v35
  %v74 = vunpack.c.l.b16 %v36
  %v75 = vunpack.c.l.b16 %v37
  %v76 = vunpack.c.l.b16 %v38
  %v77 = vunpack.c.l.b16 %v39
  %v78 = vunpack.c.l.b16 %v40
  %v79 = vunpack.c.l.b16 %v41
  %v80 = vunpack.c.l.b16 %v42
  %v81 = vunpack.c.l.b16 %v43
  %v82 = vpack.c.b16 %v67, %v66
  %v83 = vpack.c.b16 %v69, %v68
  %v84 = vpack.c.b16 %v71, %v70
  %v85 = vpack.c.b16 %v73, %v72
  %v86 = vpack.c.b16 %v75, %v74
  %v87 = vpack.c.b16 %v77, %v76
  %v88 = vpack.c.b16 %v79, %v78
  %v89 = vpack.c.b16 %v81, %v80
  %98 = vmatprep.subr.bf16.mxu0 0
  %99 = vmatpush1.bf16.msra.mxu0 %v82
  %100 = vmatprep.subr.bf16.mxu0 0
  %101 = vmatpush1.bf16.msra.mxu0 %v83
  %102 = vmatprep.subr.bf16.mxu0 0
  %103 = vmatpush1.bf16.msra.mxu0 %v84
  %104 = vmatprep.subr.bf16.mxu0 0
  %105 = vmatpush1.bf16.msra.mxu0 %v85
  %106 = vmatprep.subr.bf16.mxu0 0
  %107 = vmatpush1.bf16.msra.mxu0 %v86
  %108 = vmatprep.subr.bf16.mxu0 0
  %109 = vmatpush1.bf16.msra.mxu0 %v87
  %110 = vmatprep.subr.bf16.mxu0 0
  %111 = vmatpush1.bf16.msra.mxu0 %v88
  %112 = vmatprep.subr.bf16.mxu0 0
  %113 = vmatpush1.bf16.msra.mxu0 %v89
  %114 = vmatprep.subr.bf16.mxu0 0
  %115 = vmatpush1.bf16.msra.mxu0 0
  %116 = vmatprep.subr.bf16.mxu0 0
  %117 = vmatpush1.bf16.msra.mxu0 0
  %118 = vmatprep.subr.bf16.mxu0 0
  %119 = vmatpush1.bf16.msra.mxu0 0
  %120 = vmatprep.subr.bf16.mxu0 0
  %121 = vmatpush1.bf16.msra.mxu0 0
  %122 = vmatprep.subr.bf16.mxu0 0
  %123 = vmatpush1.bf16.msra.mxu0 0
  %124 = vmatprep.subr.bf16.mxu0 0
  %125 = vmatpush1.bf16.msra.mxu0 0
  %126 = vmatprep.subr.bf16.mxu0 0
  %127 = vmatpush1.bf16.msra.mxu0 0
  %128 = vmatprep.subr.bf16.mxu0 0
  %129 = vmatpush1.bf16.msra.mxu0 0
  %130 = vmatprep.mubr.bf16.mxu0 0
  %131 = vmatmul.mubr.bf16.gmra.mrb[0].mxu0 %v48
  %v132 = vpop.f32.mrb[0].mxu0
  %v133 = vadd.f32 0.0, %v132
  %v134 = vpop.f32.mrb[0].mxu0
  %v135 = vpop.f32.mrb[0].mxu0
  %v136 = vadd.f32 0.0, %v135
  %v137 = vpop.f32.mrb[0].mxu0
  %138 = vdwg.mxu0
  %v139 = vadd.f32 %v26, %v133
  %v140 = vadd.f32 %v27, %v136
  %141 = vst [vmem:[#allocation2] sm:$0xff] %v139
  %142 = vst [vmem:[#allocation2 + $0x8] sm:$0xff] %v140
  // Predicated region
  $region22: #{salclass_forward.20} parent=0 // pred_check
    %p143 = pneg %p18
  $region23: #{salclass_forward.20} parent=0 // pred_check_branch
    %145 = sbr.rel (%p143) target = $region25
  $region24: #{salclass_forward.20} parent=0 // pred_region
    %v146 = vld [vmem:[#allocation2] sm:$0xff]
    %v147 = vld [vmem:[#allocation2 + $0x8] sm:$0xff]
    %v148 = vld [vmem:[%s2] sm:$0x1]
    %v150 = vlaneseq
    %v151 = vshrl.u32 %v150, 7
    %v152 = vsub.s32 0, %v151
    %v153 = vrot.slane %v148, %v152
    %v155 = vadd.f32 %v146, %v153
    %v156 = vadd.f32 %v147, %v153
    %v157 = vld [vmem:[%s3] sm:$0xf]
    %v158 = vld [vmem:[%s3 + $0x4] sm:$0xf]
    %v159 = vunpack.c.l.bf16 %v157
    %v160 = vunpack.c.l.bf16 %v158
    %v161 = vadd.f32 %v155, %v159
    %v162 = vadd.f32 %v156, %v160
    %v163 = vpack.c.bf16 %v162, %v161
    %v165 = vunpack.c.l.b16 %v163
    %v166 = vunpack.c.h.b16 %v163
    %v167 = vpack.c.b16 %v165, %v165
    %v168 = vpack.c.b16 %v166, %v166
    %171 = vst [vmem:[%s4] sm:$0xf] %v167
    %172 = vst [vmem:[%s4 + $0x4] sm:$0xf] %v168
  $region25: #{salclass_forward.20} parent=0 // pred_fallthru
    _
  // Predicated region
  $region26: #{salclass_forward.20} parent=0 // pred_check
    _
  $region27: #{salclass_forward.20} parent=0 // pred_check_branch
    %174 = sbr.rel (0) target = $region29
  $region28: #{salclass_forward.20} parent=0 // pred_region
    _
  $region29: #{salclass_forward.20} parent=0 // pred_fallthru
    _
  // Predicated region
  $region30: #{salclass_forward.20} parent=0 // pred_check
    _
  $region31: #{salclass_forward.20} parent=0 // pred_check_branch
    %176 = sbr.rel (0) target = $region33
  $region32: #{salclass_forward.20} parent=0 // pred_region
    _
  $region33: #{salclass_forward.20} parent=0 // pred_fallthru
    _

// kernel: salclass_forward.21
$region0: #{salclass_forward.21}
  #allocation0 [shape = 'u32[]', space=smem, size = 0x4, offset = 0x4, fixed_abs, tag = 'smem constant byte address 0x4 - core index']
  #allocation1 [shape = 'u32[144,128]{1,0:T(1,128)}', space=vmem, size = 0x12000, scoped, tag = 'internal scratch']
  #allocation2 [shape = 'f32[16,128]{1,0:T(8,128)}', space=vmem, size = 0x2000, scoped, tag = 'scratch operand']
  %s0 = inlined_call_operand.vmem [shape: bf16[16,128], index: 0, kind: input, shape index: {}]
  %s1 = inlined_call_operand.vmem [shape: f32[1,128], index: 1, kind: input, shape index: {}]
  %s2 = inlined_call_operand.vmem [shape: f32[1,128], index: 2, kind: input, shape index: {}]
  %s3 = inlined_call_operand.vmem [shape: bf16[128,128], index: 3, kind: input, shape index: {}]
  %s4 = inlined_call_operand.vmem [shape: f32[1,128], index: 4, kind: input, shape index: {}]
  %s5 = inlined_call_operand.vmem [shape: bf16[16,128], index: 5, kind: output, shape index: {}]
  %s6 = sld [smem:[#allocation0]]
  $region38: #{salclass_forward.21} parent=0
    _
  %s8 = ssub.s32 1, %s6
  %s9 = scalar_select 0, %s8, %s6
  // Predicated region
  $region2: #{salclass_forward.21} parent=0 // pred_check
    _
  $region3: #{salclass_forward.21} parent=0 // pred_check_branch
    %11 = sbr.rel (0) target = $region5
  $region4: #{salclass_forward.21} parent=0 // pred_region
    _
  $region5: #{salclass_forward.21} parent=0 // pred_fallthru
    _
  // Predicated region
  $region6: #{salclass_forward.21} parent=0 // pred_check
    _
  $region7: #{salclass_forward.21} parent=0 // pred_check_branch
    %13 = sbr.rel (0) target = $region9
  $region8: #{salclass_forward.21} parent=0 // pred_region
    _
  $region9: #{salclass_forward.21} parent=0 // pred_fallthru
    _
  // Predicated region
  $region10: #{salclass_forward.21} parent=0 // pred_check
    _
  $region11: #{salclass_forward.21} parent=0 // pred_check_branch
    %15 = sbr.rel (0) target = $region13
  $region12: #{salclass_forward.21} parent=0 // pred_region
    _
  $region13: #{salclass_forward.21} parent=0 // pred_fallthru
    _
  // Predicated region
  $region14: #{salclass_forward.21} parent=0 // pred_check
    _
  $region15: #{salclass_forward.21} parent=0 // pred_check_branch
    %17 = sbr.rel (0) target = $region17
  $region16: #{salclass_forward.21} parent=0 // pred_region
    _
  $region17: #{salclass_forward.21} parent=0 // pred_fallthru
    _
  // Predicated region
  $region18: #{salclass_forward.21} parent=0 // pred_check
    _
  $region19: #{salclass_forward.21} parent=0 // pred_check_branch
    %19 = sbr.rel (0) target = $region21
  $region20: #{salclass_forward.21} parent=0 // pred_region
    _
  $region21: #{salclass_forward.21} parent=0 // pred_fallthru
    _
  %p21 = scmp.eq.s32.totalorder 0, 0
  // Predicated region
  $region22: #{salclass_forward.21} parent=0 // pred_check
    %p22 = pneg %p21
  $region23: #{salclass_forward.21} parent=0 // pred_check_branch
    %24 = sbr.rel (%p22) target = $region25
  $region24: #{salclass_forward.21} parent=0 // pred_region
    %25 = vst [vmem:[#allocation2] sm:$0xff] 0.0
    %26 = vst [vmem:[#allocation2 + $0x8] sm:$0xff] 0.0
  $region25: #{salclass_forward.21} parent=0 // pred_fallthru
    _
  %v27 = vld [vmem:[%s0] sm:$0xf]
  %v28 = vld [vmem:[%s0 + $0x4] sm:$0xf]
  %v29 = vunpack.c.l.bf16 %v27
  %v30 = vunpack.c.l.bf16 %v28
  %31 = vadd.xlane.f32.xlu0 %v29
  %v32 = vpop.xlane.xlu0 %31
  %33 = vadd.xlane.f32.xlu0 %v30
  %v34 = vpop.xlane.xlu0 %33
  %v35 = vmul.f32 %v32, 0.03125
  %v36 = vmul.f32 %v34, 0.03125
  %v37 = vmul.f32 %v29, %v29
  %v38 = vmul.f32 %v30, %v30
  %39 = vadd.xlane.f32.xlu0 %v37
  %v40 = vpop.xlane.xlu0 %39
  %41 = vadd.xlane.f32.xlu0 %v38
  %v42 = vpop.xlane.xlu0 %41
  %v43 = vmul.f32 %v40, 0.03125
  %v44 = vmul.f32 %v42, 0.03125
  %v45 = vmul.f32 %v35, %v35
  %v46 = vmul.f32 %v36, %v36
  %v47 = vsub.f32 %v43, %v45
  %v48 = vsub.f32 %v44, %v46
  %v49 = vadd.f32 %v47, 1e-05
  %v50 = vadd.f32 %v48, 1e-05
  %v51 = vrsqrt.pop %v49
  %v52 = vrsqrt.pop %v50
  %v53 = vsub.f32 %v29, %v35
  %v54 = vsub.f32 %v30, %v36
  %v55 = vmul.f32 %v53, %v51
  %v56 = vmul.f32 %v54, %v52
  %v57 = vld [vmem:[%s1] sm:$0x1]
  %v59 = vlaneseq
  %v60 = vshrl.u32 %v59, 7
  %v61 = vsub.s32 0, %v60
  %v62 = vrot.slane %v57, %v61
  %v64 = vmul.f32 %v55, %v62
  %v65 = vmul.f32 %v56, %v62
  %v66 = vld [vmem:[%s2] sm:$0x1]
  %v68 = vlaneseq
  %v69 = vshrl.u32 %v68, 7
  %v70 = vsub.s32 0, %v69
  %v71 = vrot.slane %v66, %v70
  %v73 = vadd.f32 %v64, %v71
  %v74 = vadd.f32 %v65, %v71
  %v75 = vpack.c.bf16 %v74, %v73
  %v76 = vld [vmem:[#allocation2] sm:$0xff]
  %v77 = vld [vmem:[#allocation2 + $0x8] sm:$0xff]
  %v78 = vld [vmem:[%s3] sm:$0xf]
  %v79 = vld [vmem:[%s3 + $0x4] sm:$0xf]
  %v80 = vld [vmem:[%s3 + $0x8] sm:$0xf]
  %v81 = vld [vmem:[%s3 + $0xc] sm:$0xf]
  %v82 = vld [vmem:[%s3 + $0x10] sm:$0xf]
  %v83 = vld [vmem:[%s3 + $0x14] sm:$0xf]
  %v84 = vld [vmem:[%s3 + $0x18] sm:$0xf]
  %v85 = vld [vmem:[%s3 + $0x1c] sm:$0xf]
  %v86 = vld [vmem:[%s3 + $0x20] sm:$0xf]
  %v87 = vld [vmem:[%s3 + $0x24] sm:$0xf]
  %v88 = vld [vmem:[%s3 + $0x28] sm:$0xf]
  %v89 = vld [vmem:[%s3 + $0x2c] sm:$0xf]
  %v90 = vld [vmem:[%s3 + $0x30] sm:$0xf]
  %v91 = vld [vmem:[%s3 + $0x34] sm:$0xf]
  %v92 = vld [vmem:[%s3 + $0x38] sm:$0xf]
  %v93 = vld [vmem:[%s3 + $0x3c] sm:$0xf]
  %v110 = vunpack.c.l.b16 %v78
  %v111 = vunpack.c.l.b16 %v79
  %v112 = vunpack.c.l.b16 %v80
  %v113 = vunpack.c.l.b16 %v81
  %v114 = vunpack.c.l.b16 %v82
  %v115 = vunpack.c.l.b16 %v83
  %v116 = vunpack.c.l.b16 %v84
  %v117 = vunpack.c.l.b16 %v85
  %v118 = vunpack.c.l.b16 %v86
  %v119 = vunpack.c.l.b16 %v87
  %v120 = vunpack.c.l.b16 %v88
  %v121 = vunpack.c.l.b16 %v89
  %v122 = vunpack.c.l.b16 %v90
  %v123 = vunpack.c.l.b16 %v91
  %v124 = vunpack.c.l.b16 %v92
  %v125 = vunpack.c.l.b16 %v93
  %v126 = vpack.c.b16 %v111, %v110
  %v127 = vpack.c.b16 %v113, %v112
  %v128 = vpack.c.b16 %v115, %v114
  %v129 = vpack.c.b16 %v117, %v116
  %v130 = vpack.c.b16 %v119, %v118
  %v131 = vpack.c.b16 %v121, %v120
  %v132 = vpack.c.b16 %v123, %v122
  %v133 = vpack.c.b16 %v125, %v124
  %142 = vmatprep.subr.bf16.mxu0 0
  %143 = vmatpush1.bf16.msra.mxu0 %v126
  %144 = vmatprep.subr.bf16.mxu0 0
  %145 = vmatpush1.bf16.msra.mxu0 %v127
  %146 = vmatprep.subr.bf16.mxu0 0
  %147 = vmatpush1.bf16.msra.mxu0 %v128
  %148 = vmatprep.subr.bf16.mxu0 0
  %149 = vmatpush1.bf16.msra.mxu0 %v129
  %150 = vmatprep.subr.bf16.mxu0 0
  %151 = vmatpush1.bf16.msra.mxu0 %v130
  %152 = vmatprep.subr.bf16.mxu0 0
  %153 = vmatpush1.bf16.msra.mxu0 %v131
  %154 = vmatprep.subr.bf16.mxu0 0
  %155 = vmatpush1.bf16.msra.mxu0 %v132
  %156 = vmatprep.subr.bf16.mxu0 0
  %157 = vmatpush1.bf16.msra.mxu0 %v133
  %158 = vmatprep.subr.bf16.mxu0 0
  %159 = vmatpush1.bf16.msra.mxu0 0
  %160 = vmatprep.subr.bf16.mxu0 0
  %161 = vmatpush1.bf16.msra.mxu0 0
  %162 = vmatprep.subr.bf16.mxu0 0
  %163 = vmatpush1.bf16.msra.mxu0 0
  %164 = vmatprep.subr.bf16.mxu0 0
  %165 = vmatpush1.bf16.msra.mxu0 0
  %166 = vmatprep.subr.bf16.mxu0 0
  %167 = vmatpush1.bf16.msra.mxu0 0
  %168 = vmatprep.subr.bf16.mxu0 0
  %169 = vmatpush1.bf16.msra.mxu0 0
  %170 = vmatprep.subr.bf16.mxu0 0
  %171 = vmatpush1.bf16.msra.mxu0 0
  %172 = vmatprep.subr.bf16.mxu0 0
  %173 = vmatpush1.bf16.msra.mxu0 0
  %174 = vmatprep.mubr.bf16.mxu0 0
  %175 = vmatmul.mubr.bf16.gmra.mrb[0].mxu0 %v75
  %v176 = vpop.f32.mrb[0].mxu0
  %v177 = vadd.f32 0.0, %v176
  %v178 = vpop.f32.mrb[0].mxu0
  %v179 = vpop.f32.mrb[0].mxu0
  %v180 = vadd.f32 0.0, %v179
  %v181 = vpop.f32.mrb[0].mxu0
  %182 = vdwg.mxu0
  %v183 = vadd.f32 %v76, %v177
  %v184 = vadd.f32 %v77, %v180
  %185 = vst [vmem:[#allocation2] sm:$0xff] %v183
  %186 = vst [vmem:[#allocation2 + $0x8] sm:$0xff] %v184
  // Predicated region
  $region26: #{salclass_forward.21} parent=0 // pred_check
    %p187 = pneg %p21
  $region27: #{salclass_forward.21} parent=0 // pred_check_branch
    %189 = sbr.rel (%p187) target = $region29
  $region28: #{salclass_forward.21} parent=0 // pred_region
    %v190 = vld [vmem:[#allocation2] sm:$0xff]
    %v191 = vld [vmem:[#allocation2 + $0x8] sm:$0xff]
    %v192 = vld [vmem:[%s4] sm:$0x1]
    %v194 = vlaneseq
    %v195 = vshrl.u32 %v194, 7
    %v196 = vsub.s32 0, %v195
    %v197 = vrot.slane %v192, %v196
    %v199 = vadd.f32 %v190, %v197
    %v200 = vadd.f32 %v191, %v197
    %v201 = vmul.f32 %v199, 0.70710677
    %v202 = vmul.f32 %v200, 0.70710677
    %v203 = vand.u32 2147483647, %v201
    %v204 = vand.u32 2147483647, %v202
    %v205 = vmul.f32 %v203, 0.3275911
    %v206 = vmul.f32 %v204, 0.3275911
    %v207 = vadd.f32 %v205, 1.0
    %v208 = vadd.f32 %v206, 1.0
    %v209 = vrcp.pop %v207
    %v210 = vrcp.pop %v208
    %v211 = vmul.f32 %v209, 1.0614054
    %v212 = vmul.f32 %v210, 1.0614054
    %v213 = vadd.f32 %v211, -1.4531521
    %v214 = vadd.f32 %v212, -1.4531521
    %v215 = vmul.f32 %v213, %v209
    %v216 = vmul.f32 %v214, %v210
    %v217 = vadd.f32 %v215, 1.4214138
    %v218 = vadd.f32 %v216, 1.4214138
    %v219 = vmul.f32 %v217, %v209
    %v220 = vmul.f32 %v218, %v210
    %v221 = vadd.f32 %v219, -0.28449672
    %v222 = vadd.f32 %v220, -0.28449672
    %v223 = vmul.f32 %v221, %v209
    %v224 = vmul.f32 %v222, %v210
    %v225 = vadd.f32 %v223, 0.2548296
    %v226 = vadd.f32 %v224, 0.2548296
    %v227 = vmul.f32 %v225, %v209
    %v228 = vmul.f32 %v226, %v210
    %v229 = vsub.f32 0.0, %v203
    %v230 = vsub.f32 0.0, %v204
    %v231 = vmul.f32 %v229, %v203
    %v232 = vmul.f32 %v230, %v204
    %v233 = vmul.f32 %v231, 1.442695
    %v234 = vpow.pop %v233
    %v235 = vmul.f32 %v232, 1.442695
    %v236 = vpow.pop %v235
    %v237 = vmul.f32 %v227, %v234
    %v238 = vmul.f32 %v228, %v236
    %v239 = vsub.f32 1.0, %v237
    %v240 = vsub.f32 1.0, %v238
    %vm241 = vcmp.ge.f32.partialorder %v201, 0.0
    %vm242 = vcmp.ge.f32.partialorder %v202, 0.0
    %v243 = vsub.f32 0.0, %v239
    %v244 = vsub.f32 0.0, %v240
    %v245 = vsel %vm241, %v239, %v243
    %v246 = vsel %vm242, %v240, %v244
    %v247 = vmul.f32 %v199, 0.5
    %v248 = vmul.f32 %v200, 0.5
    %v249 = vadd.f32 %v245, 1.0
    %v250 = vadd.f32 %v246, 1.0
    %v251 = vmul.f32 %v247, %v249
    %v252 = vmul.f32 %v248, %v250
    %v253 = vpack.c.bf16 %v252, %v251
    %v255 = vunpack.c.l.b16 %v253
    %v256 = vunpack.c.h.b16 %v253
    %v257 = vpack.c.b16 %v255, %v255
    %v258 = vpack.c.b16 %v256, %v256
    %261 = vst [vmem:[%s5] sm:$0xf] %v257
    %262 = vst [vmem:[%s5 + $0x4] sm:$0xf] %v258
  $region29: #{salclass_forward.21} parent=0 // pred_fallthru
    _
  // Predicated region
  $region30: #{salclass_forward.21} parent=0 // pred_check
    _
  $region31: #{salclass_forward.21} parent=0 // pred_check_branch
    %264 = sbr.rel (0) target = $region33
  $region32: #{salclass_forward.21} parent=0 // pred_region
    _
  $region33: #{salclass_forward.21} parent=0 // pred_fallthru
    _
  // Predicated region
  $region34: #{salclass_forward.21} parent=0 // pred_check
    _
  $region35: #{salclass_forward.21} parent=0 // pred_check_branch
    %266 = sbr.rel (0) target = $region37
  $region36: #{salclass_forward.21} parent=0 // pred_region
    _
  $region37: #{salclass_forward.21} parent=0 // pred_fallthru
    _

// kernel: salclass_forward.29
$region0: #{salclass_forward.29}
  #allocation0 [shape = 'u32[]', space=smem, size = 0x4, offset = 0x4, fixed_abs, tag = 'smem constant byte address 0x4 - core index']
  #allocation1 [shape = 'u32[144,128]{1,0:T(1,128)}', space=vmem, size = 0x12000, scoped, tag = 'internal scratch']
  #allocation2 [shape = 'f32[8,128]{1,0:T(8,128)}', space=vmem, size = 0x1000, scoped, tag = 'scratch operand']
  %s0 = inlined_call_operand.vmem [shape: bf16[8,128], index: 0, kind: input, shape index: {}]
  %s1 = inlined_call_operand.vmem [shape: f32[1,128], index: 1, kind: input, shape index: {}]
  %s2 = inlined_call_operand.vmem [shape: f32[1,128], index: 2, kind: input, shape index: {}]
  %s3 = inlined_call_operand.vmem [shape: bf16[128,128], index: 3, kind: input, shape index: {}]
  %s4 = inlined_call_operand.vmem [shape: f32[1,128], index: 4, kind: input, shape index: {}]
  %s5 = inlined_call_operand.vmem [shape: f32[8,128], index: 5, kind: output, shape index: {}]
  %s6 = sld [smem:[#allocation0]]
  $region38: #{salclass_forward.29} parent=0
    _
  %s8 = ssub.s32 1, %s6
  %s9 = scalar_select 0, %s8, %s6
  // Predicated region
  $region2: #{salclass_forward.29} parent=0 // pred_check
    _
  $region3: #{salclass_forward.29} parent=0 // pred_check_branch
    %11 = sbr.rel (0) target = $region5
  $region4: #{salclass_forward.29} parent=0 // pred_region
    _
  $region5: #{salclass_forward.29} parent=0 // pred_fallthru
    _
  // Predicated region
  $region6: #{salclass_forward.29} parent=0 // pred_check
    _
  $region7: #{salclass_forward.29} parent=0 // pred_check_branch
    %13 = sbr.rel (0) target = $region9
  $region8: #{salclass_forward.29} parent=0 // pred_region
    _
  $region9: #{salclass_forward.29} parent=0 // pred_fallthru
    _
  // Predicated region
  $region10: #{salclass_forward.29} parent=0 // pred_check
    _
  $region11: #{salclass_forward.29} parent=0 // pred_check_branch
    %15 = sbr.rel (0) target = $region13
  $region12: #{salclass_forward.29} parent=0 // pred_region
    _
  $region13: #{salclass_forward.29} parent=0 // pred_fallthru
    _
  // Predicated region
  $region14: #{salclass_forward.29} parent=0 // pred_check
    _
  $region15: #{salclass_forward.29} parent=0 // pred_check_branch
    %17 = sbr.rel (0) target = $region17
  $region16: #{salclass_forward.29} parent=0 // pred_region
    _
  $region17: #{salclass_forward.29} parent=0 // pred_fallthru
    _
  // Predicated region
  $region18: #{salclass_forward.29} parent=0 // pred_check
    _
  $region19: #{salclass_forward.29} parent=0 // pred_check_branch
    %19 = sbr.rel (0) target = $region21
  $region20: #{salclass_forward.29} parent=0 // pred_region
    _
  $region21: #{salclass_forward.29} parent=0 // pred_fallthru
    _
  %p21 = scmp.eq.s32.totalorder 0, 0
  // Predicated region
  $region22: #{salclass_forward.29} parent=0 // pred_check
    %p22 = pneg %p21
  $region23: #{salclass_forward.29} parent=0 // pred_check_branch
    %24 = sbr.rel (%p22) target = $region25
  $region24: #{salclass_forward.29} parent=0 // pred_region
    %25 = vst [vmem:[#allocation2] sm:$0xff] 0.0
  $region25: #{salclass_forward.29} parent=0 // pred_fallthru
    _
  %v26 = vld [vmem:[%s0] sm:$0xf]
  %v27 = vunpack.c.l.bf16 %v26
  %28 = vadd.xlane.f32.xlu0 %v27
  %v29 = vpop.xlane.xlu0 %28
  %v30 = vmul.f32 %v29, 0.03125
  %v31 = vmul.f32 %v27, %v27
  %32 = vadd.xlane.f32.xlu0 %v31
  %v33 = vpop.xlane.xlu0 %32
  %v34 = vmul.f32 %v33, 0.03125
  %v35 = vmul.f32 %v30, %v30
  %v36 = vsub.f32 %v34, %v35
  %v37 = vadd.f32 %v36, 1e-05
  %v38 = vrsqrt.pop %v37
  %v39 = vsub.f32 %v27, %v30
  %v40 = vmul.f32 %v39, %v38
  %v41 = vld [vmem:[%s1] sm:$0x1]
  %v43 = vlaneseq
  %v44 = vshrl.u32 %v43, 7
  %v45 = vsub.s32 0, %v44
  %v46 = vrot.slane %v41, %v45
  %v48 = vmul.f32 %v40, %v46
  %v49 = vld [vmem:[%s2] sm:$0x1]
  %v51 = vlaneseq
  %v52 = vshrl.u32 %v51, 7
  %v53 = vsub.s32 0, %v52
  %v54 = vrot.slane %v49, %v53
  %v56 = vadd.f32 %v48, %v54
  %v57 = vpack.c.bf16 %v56, %v56
  %v58 = vld [vmem:[#allocation2] sm:$0xff]
  %v59 = vld [vmem:[%s3] sm:$0xf]
  %v60 = vld [vmem:[%s3 + $0x4] sm:$0xf]
  %v61 = vld [vmem:[%s3 + $0x8] sm:$0xf]
  %v62 = vld [vmem:[%s3 + $0xc] sm:$0xf]
  %v63 = vld [vmem:[%s3 + $0x10] sm:$0xf]
  %v64 = vld [vmem:[%s3 + $0x14] sm:$0xf]
  %v65 = vld [vmem:[%s3 + $0x18] sm:$0xf]
  %v66 = vld [vmem:[%s3 + $0x1c] sm:$0xf]
  %v67 = vld [vmem:[%s3 + $0x20] sm:$0xf]
  %v68 = vld [vmem:[%s3 + $0x24] sm:$0xf]
  %v69 = vld [vmem:[%s3 + $0x28] sm:$0xf]
  %v70 = vld [vmem:[%s3 + $0x2c] sm:$0xf]
  %v71 = vld [vmem:[%s3 + $0x30] sm:$0xf]
  %v72 = vld [vmem:[%s3 + $0x34] sm:$0xf]
  %v73 = vld [vmem:[%s3 + $0x38] sm:$0xf]
  %v74 = vld [vmem:[%s3 + $0x3c] sm:$0xf]
  %v91 = vunpack.c.l.b16 %v59
  %v92 = vunpack.c.l.b16 %v60
  %v93 = vunpack.c.l.b16 %v61
  %v94 = vunpack.c.l.b16 %v62
  %v95 = vunpack.c.l.b16 %v63
  %v96 = vunpack.c.l.b16 %v64
  %v97 = vunpack.c.l.b16 %v65
  %v98 = vunpack.c.l.b16 %v66
  %v99 = vunpack.c.l.b16 %v67
  %v100 = vunpack.c.l.b16 %v68
  %v101 = vunpack.c.l.b16 %v69
  %v102 = vunpack.c.l.b16 %v70
  %v103 = vunpack.c.l.b16 %v71
  %v104 = vunpack.c.l.b16 %v72
  %v105 = vunpack.c.l.b16 %v73
  %v106 = vunpack.c.l.b16 %v74
  %v107 = vpack.c.b16 %v92, %v91
  %v108 = vpack.c.b16 %v94, %v93
  %v109 = vpack.c.b16 %v96, %v95
  %v110 = vpack.c.b16 %v98, %v97
  %v111 = vpack.c.b16 %v100, %v99
  %v112 = vpack.c.b16 %v102, %v101
  %v113 = vpack.c.b16 %v104, %v103
  %v114 = vpack.c.b16 %v106, %v105
  %123 = vmatprep.subr.bf16.mxu0 0
  %124 = vmatpush1.bf16.msra.mxu0 %v107
  %125 = vmatprep.subr.bf16.mxu0 0
  %126 = vmatpush1.bf16.msra.mxu0 %v108
  %127 = vmatprep.subr.bf16.mxu0 0
  %128 = vmatpush1.bf16.msra.mxu0 %v109
  %129 = vmatprep.subr.bf16.mxu0 0
  %130 = vmatpush1.bf16.msra.mxu0 %v110
  %131 = vmatprep.subr.bf16.mxu0 0
  %132 = vmatpush1.bf16.msra.mxu0 %v111
  %133 = vmatprep.subr.bf16.mxu0 0
  %134 = vmatpush1.bf16.msra.mxu0 %v112
  %135 = vmatprep.subr.bf16.mxu0 0
  %136 = vmatpush1.bf16.msra.mxu0 %v113
  %137 = vmatprep.subr.bf16.mxu0 0
  %138 = vmatpush1.bf16.msra.mxu0 %v114
  %139 = vmatprep.subr.bf16.mxu0 0
  %140 = vmatpush1.bf16.msra.mxu0 0
  %141 = vmatprep.subr.bf16.mxu0 0
  %142 = vmatpush1.bf16.msra.mxu0 0
  %143 = vmatprep.subr.bf16.mxu0 0
  %144 = vmatpush1.bf16.msra.mxu0 0
  %145 = vmatprep.subr.bf16.mxu0 0
  %146 = vmatpush1.bf16.msra.mxu0 0
  %147 = vmatprep.subr.bf16.mxu0 0
  %148 = vmatpush1.bf16.msra.mxu0 0
  %149 = vmatprep.subr.bf16.mxu0 0
  %150 = vmatpush1.bf16.msra.mxu0 0
  %151 = vmatprep.subr.bf16.mxu0 0
  %152 = vmatpush1.bf16.msra.mxu0 0
  %153 = vmatprep.subr.bf16.mxu0 0
  %154 = vmatpush1.bf16.msra.mxu0 0
  %155 = vmatprep.mubr.bf16.mxu0 0
  %156 = vmatmul.mubr.bf16.gmra.mrb[0].mxu0 %v57
  %v157 = vpop.f32.mrb[0].mxu0
  %v158 = vadd.f32 0.0, %v157
  %v159 = vpop.f32.mrb[0].mxu0
  %v160 = vpop.f32.mrb[0].mxu0
  %v161 = vpop.f32.mrb[0].mxu0
  %162 = vdwg.mxu0
  %v163 = vadd.f32 %v58, %v158
  %164 = vst [vmem:[#allocation2] sm:$0xff] %v163
  // Predicated region
  $region26: #{salclass_forward.29} parent=0 // pred_check
    %p165 = pneg %p21
  $region27: #{salclass_forward.29} parent=0 // pred_check_branch
    %167 = sbr.rel (%p165) target = $region29
  $region28: #{salclass_forward.29} parent=0 // pred_region
    %v168 = vld [vmem:[#allocation2] sm:$0xff]
    %v169 = vld [vmem:[%s4] sm:$0x1]
    %v171 = vlaneseq
    %v172 = vshrl.u32 %v171, 7
    %v173 = vsub.s32 0, %v172
    %v174 = vrot.slane %v169, %v173
    %v176 = vadd.f32 %v168, %v174
    %177 = vst [vmem:[%s5] sm:$0xff] %v176
  $region29: #{salclass_forward.29} parent=0 // pred_fallthru
    _
  // Predicated region
  $region30: #{salclass_forward.29} parent=0 // pred_check
    _
  $region31: #{salclass_forward.29} parent=0 // pred_check_branch
    %179 = sbr.rel (0) target = $region33
  $region32: #{salclass_forward.29} parent=0 // pred_region
    _
  $region33: #{salclass_forward.29} parent=0 // pred_fallthru
    _
  // Predicated region
  $region34: #{salclass_forward.29} parent=0 // pred_check
    _
  $region35: #{salclass_forward.29} parent=0 // pred_check_branch
    %181 = sbr.rel (0) target = $region37
  $region36: #{salclass_forward.29} parent=0 // pred_region
    _
  $region37: #{salclass_forward.29} parent=0 // pred_fallthru
    _

</llo_original>
